<compile_context>
chip_gen: v6e
topology: v6e:2x2x1
jax: 0.10.0
libtpu: 0.0.40
codegen_flags: <defaults>
</compile_context>

<pallas_src>
import functools

import jax
import jax.numpy as jnp
import numpy as np
from jax.experimental import pallas as pl
from jax.experimental.pallas import tpu as pltpu


# ---------------------------------------------------------------------------
# Fused Pallas kernel: conv1 -> conv2 -> fc -> (policy|value), 4 MXU passes.
# ---------------------------------------------------------------------------
def _fused_kernel(p1w_ref, w1_ref, b1_ref, w2_ref, b2_ref, bfc_ref,
                  wh_ref, bh_ref, wfc_hbm_ref, out_ref, wfc_vmem_ref, wfc_sem):
    b_pad = out_ref.shape[0]              # padded batch rows (8)
    c3 = w2_ref.shape[1]                  # conv2 out channels (64)
    s2 = wfc_vmem_ref.shape[0] // c3      # conv2 spatial positions (16)

    # Overlap the largest weight DMA (fc weight, ~512 KiB bf16) with conv compute.
    # TODO(synk): in a rollout loop with fixed weights, turn this into a
    # cross-call prefetch (P10: start the copy in the previous invocation and
    # hand the DMA semaphore + VMEM ref forward) so the weight stream vanishes.
    wfc_cp = pltpu.make_async_copy(wfc_hbm_ref, wfc_vmem_ref, wfc_sem)
    wfc_cp.start()

    # conv1 (+bias+ReLU): ONE MXU pass against a block-diagonal weight, one
    # 16x32 block per conv2 tap.  conv2's zero padding of post-ReLU y1 is
    # emulated by the -1e4 sentinel (gathered as 1.0 into the K-padding lane of
    # out-of-bounds taps, matched by a -1e4 weight row) which this ReLU zeroes:
    # no mask input, no extra VPU multiply.
    h1 = jnp.dot(p1w_ref[...], w1_ref[...], preferred_element_type=jnp.float32)
    h1 = jnp.maximum(h1 + b1_ref[...], 0.0).astype(jnp.bfloat16)   # (s2*b_pad, 288)

    # conv2 (+bias+ReLU): ONE MXU pass, K = 9 taps * 32 channels = 288.
    h2 = jnp.dot(h1, w2_ref[...], preferred_element_type=jnp.float32)
    h2 = jnp.maximum(h2 + b2_ref[...], 0.0)       # (s2*b_pad, c3), row = s*b_pad + b

    # Rearrange to (b_pad, s2*c3) -- the NCHW-flatten order baked into wfc --
    # entirely in vregs: pair 64-lane blocks into vreg-aligned 128-lane blocks
    # first, then one lane-aligned concat.  No VMEM staging round-trip needed.
    blocks = [h2[s * b_pad:(s + 1) * b_pad, :] for s in range(s2)]
    if s2 % 2 == 0:
        blocks = [jnp.concatenate(blocks[2 * p:2 * p + 2], axis=1)
                  for p in range(s2 // 2)]
    h2f = blocks[0] if len(blocks) == 1 else jnp.concatenate(blocks, axis=1)

    # fc (+bias+ReLU): single long-K (s2*c3 = 1024) MXU pass on the prefetched wfc.
    wfc_cp.wait()
    hfc = jnp.dot(h2f.astype(jnp.bfloat16), wfc_vmem_ref[...],
                  preferred_element_type=jnp.float32)
    hfc = jnp.maximum(hfc + bfc_ref[...], 0.0).astype(jnp.bfloat16)

    # Fused policy|value heads: one MXU pass + one unmasked lane-dense store.
    out_ref[...] = (jnp.dot(hfc, wh_ref[...], preferred_element_type=jnp.float32)
                    + bh_ref[...])


def _full_spec(shape):
    return pl.BlockSpec(shape, lambda *_: (0,) * len(shape))


def _fused_forward_pallas(p1w, kp, *, b_pad):
    kfc, nfc = kp["wfc"].shape                      # (1024, 256)
    args = (p1w, kp["w1"], kp["b1"], kp["w2"], kp["b2"],
            kp["bfc"], kp["wh"], kp["bh"], kp["wfc"])
    in_specs = ([_full_spec(a.shape) for a in args[:-1]]
                + [pl.BlockSpec(memory_space=pl.ANY)])   # wfc stays in HBM
    # TODO(synk): for large batches add a grid axis over batch-row blocks
    # ("parallel"; size blocks for 64 MiB VMEM on v7x). At B=2 one block wins.
    return pl.pallas_call(
        _fused_kernel,
        out_shape=jax.ShapeDtypeStruct((b_pad, 128), jnp.float32),
        grid_spec=pltpu.PrefetchScalarGridSpec(
            num_scalar_prefetch=0,
            grid=(1,),
            in_specs=in_specs,
            out_specs=_full_spec((b_pad, 128)),
            scratch_shapes=[
                pltpu.VMEM((kfc, nfc), jnp.bfloat16),   # wfc landing buffer
                pltpu.SemaphoreType.DMA,                # its completion sem
            ]),
        compiler_params=pltpu.CompilerParams(dimension_semantics=("arbitrary",)),
    )(*args)


# ---------------------------------------------------------------------------
# XLA glue: ONE combined static gather (im2col o conv2-tap reorder o padding
# o boundary sentinel) applied with a single jnp.take + one bf16 cast.
# ---------------------------------------------------------------------------
@functools.lru_cache(maxsize=None)
def _gather_index(B, H, W, b_pad):
    H2, W2 = (H - 1) // 2 + 1, (W - 1) // 2 + 1      # conv1 output size
    H4, W4 = (H2 - 1) // 2 + 1, (W2 - 1) // 2 + 1    # conv2 output size
    S2 = H4 * W4
    ZERO = B * H * W            # index of the appended 0.0 source element
    ONE = ZERO + 1              # index of the appended 1.0 sentinel element
    idx = np.full((S2 * b_pad, 9 * 16), ZERO, np.int32)
    for s in range(S2):
        oi, oj = divmod(s, W4)
        for t in range(9):                            # conv2 kernel tap
            ti, tj = divmod(t, 3)
            ci, cj = 2 * oi - 1 + ti, 2 * oj - 1 + tj  # conv1 output position
            if not (0 <= ci < H2 and 0 <= cj < W2):
                # out-of-bounds conv2 tap -> 1.0 sentinel lane (w1 row = -1e4)
                idx[s * b_pad:s * b_pad + B, t * 16 + 9] = ONE
                continue
            for k in range(9):                        # conv1 kernel tap
                ki, kj = divmod(k, 3)
                ii, jj = 2 * ci - 1 + ki, 2 * cj - 1 + kj
                if 0 <= ii < H and 0 <= jj < W:
                    for b in range(B):
                        idx[s * b_pad + b, t * 16 + k] = b * H * W + ii * W + jj
    return idx


def actor_critic_forward(kp, x_nchw, *, n_actions, b_pad=8):
    B, C, H, W = x_nchw.shape
    assert C == 1, "module hardcodes Conv2d(1, 32, ...)"
    gidx = _gather_index(B, H, W, b_pad)               # static trace-time table
    flat = jnp.concatenate([x_nchw.reshape(B * H * W).astype(jnp.float32),
                            jnp.array([0.0, 1.0], jnp.float32)])
    p1w = jnp.take(flat, gidx).astype(jnp.bfloat16)    # (S2*b_pad, 144)

    heads = _fused_forward_pallas(p1w, kp, b_pad=b_pad)
    policy = heads[:B, :n_actions]
    value = heads[:B, n_actions:n_actions + 1]
    return policy, value


# ---------------------------------------------------------------------------
# One-time parameter preparation (block-diag conv1, flatten fold, pad, bf16).
# ---------------------------------------------------------------------------
def prepare_params(params, input_shape, n_actions):
    C, H, W = input_shape
    assert C == 1, "module hardcodes Conv2d(1, 32, ...)"
    H2, W2 = (H - 1) // 2 + 1, (W - 1) // 2 + 1
    H4, W4 = (H2 - 1) // 2 + 1, (W2 - 1) // 2 + 1
    S2 = H4 * W4
    n_head = n_actions + 1
    assert n_head <= 128
    bf16 = jnp.bfloat16

    # conv1 weight -> block-diagonal (9*16, 9*32): block t (= conv2 tap) holds
    # the (9,32) conv1 weight in rows t*16..t*16+8; row t*16+9 is the -1e4
    # boundary sentinel; rows t*16+10..15 stay zero (K padding).
    w1 = np.asarray(params["w1"], np.float32).reshape(9 * C, 32)
    w1bd = np.zeros((9 * 16, 9 * 32), np.float32)
    for t in range(9):
        w1bd[t * 16:t * 16 + 9, t * 32:(t + 1) * 32] = w1
        w1bd[t * 16 + 9, t * 32:(t + 1) * 32] = -1e4
    b1t = np.tile(np.asarray(params["b1"], np.float32).reshape(1, 32), (1, 9))

    # conv2 weight in HWIO-flat (tap*32 + c_in, 64) order -> matches h1 columns.
    w2 = jnp.asarray(params["w2"]).reshape(9 * 32, 64)

    # Fold the PyTorch NCHW flatten into the fc weight: row c*S2+s -> s*64+c.
    wfc = (jnp.asarray(params["wfc"]).reshape(64, S2, 256)
           .transpose(1, 0, 2).reshape(64 * S2, 256))

    # Concatenate + zero-pad the policy/value heads to 128 output lanes.
    wh = jnp.pad(jnp.concatenate([params["wp"], params["wv"]], axis=1),
                 ((0, 0), (0, 128 - n_head)))
    bh = jnp.pad(jnp.concatenate([params["bp"], params["bv"]], axis=1),
                 ((0, 0), (0, 128 - n_head)))
    return dict(
        w1=jnp.asarray(w1bd, bf16),
        b1=jnp.asarray(b1t, jnp.float32),
        w2=w2.astype(bf16),
        b2=jnp.asarray(params["b2"], jnp.float32).reshape(1, 64),
        wfc=wfc.astype(bf16),
        bfc=jnp.asarray(params["bfc"], jnp.float32).reshape(1, 256),
        wh=wh.astype(bf16),
        bh=bh.astype(jnp.float32),
    )


# ---------------------------------------------------------------------------
# Pure-JAX f32 reference (lax conv + dots) for correctness check.
# ---------------------------------------------------------------------------
def reference_forward(params, x_nchw):
    hp = jax.lax.Precision.HIGHEST
    x = jnp.transpose(x_nchw, (0, 2, 3, 1)).astype(jnp.float32)
    dn = ("NHWC", "HWIO", "NHWC")
    y1 = jax.lax.conv_general_dilated(
        x, params["w1"], (2, 2), ((1, 1), (1, 1)), dimension_numbers=dn, precision=hp
    ) + params["b1"]
    y1 = jax.nn.relu(y1)
    y2 = jax.lax.conv_general_dilated(
        y1, params["w2"], (2, 2), ((1, 1), (1, 1)), dimension_numbers=dn, precision=hp
    ) + params["b2"]
    y2 = jax.nn.relu(y2)
    B = x.shape[0]
    flat = jnp.transpose(y2, (0, 3, 1, 2)).reshape(B, -1)   # PyTorch NCHW flatten
    h = jax.nn.relu(jnp.dot(flat, params["wfc"], precision=hp) + params["bfc"])
    pol = jnp.dot(h, params["wp"], precision=hp) + params["bp"]
    val = jnp.dot(h, params["wv"], precision=hp) + params["bv"]
    return pol, val


# ---------------------------------------------------------------------------
# Deterministic synthetic parameter init (shapes from the module __init__).
# ---------------------------------------------------------------------------
def init_params(key, input_shape, n_actions):
    C, H, W = input_shape
    conv_out = 64 * (H // 4) * (W // 4)
    ks = jax.random.split(key, 10)

    def u(k, shape, fan_in):
        bound = 1.0 / np.sqrt(fan_in)
        return jax.random.uniform(k, shape, jnp.float32, -bound, bound)

    return dict(
        w1=u(ks[0], (3, 3, C, 32), 9 * C),       b1=u(ks[1], (1, 32), 9 * C),
        w2=u(ks[2], (3, 3, 32, 64), 9 * 32),     b2=u(ks[3], (1, 64), 9 * 32),
        wfc=u(ks[4], (conv_out, 256), conv_out), bfc=u(ks[5], (1, 256), conv_out),
        wp=u(ks[6], (256, n_actions), 256),      bp=u(ks[7], (1, n_actions), 256),
        wv=u(ks[8], (256, 1), 256),              bv=u(ks[9], (1, 1), 256),
    )


if __name__ == "__main__":
    key = jax.random.PRNGKey(0)
    B, C, H, W = 2, 1, 16, 16          # input_shape = (1, 16, 16)
    n_actions = 4

    params = init_params(key, (C, H, W), n_actions)
    x = jax.random.normal(jax.random.fold_in(key, 100), (B, C, H, W), jnp.float32)

    kp = prepare_params(params, (C, H, W), n_actions)     # one-time prep
    fwd = jax.jit(functools.partial(actor_critic_forward, n_actions=n_actions))

    policy, value = fwd(kp, x)
    jax.block_until_ready((policy, value))

    assert policy.shape == (B, n_actions) and value.shape == (B, 1)

    # bf16 matmul inputs / f32 accumulation vs. a pure-f32 HIGHEST-precision
    # reference: expected error is a few 1e-3, so 1e-2 gives ample margin while
    # still catching any structural/indexing/sentinel bug.
    pol_ref, val_ref = reference_forward(params, x)
    np.testing.assert_allclose(np.asarray(policy), np.asarray(pol_ref), rtol=1e-2, atol=1e-2)
    np.testing.assert_allclose(np.asarray(value), np.asarray(val_ref), rtol=1e-2, atol=1e-2)

    print("KERNEL_OK")
</pallas_src>

<mosaic_0001>
module attributes {stable_mosaic.version = 11 : i64} {
  func.func @_fused_kernel(%arg0: i32, %arg1: memref<128x144xbf16, #tpu.memory_space<vmem>>, %arg2: memref<144x288xbf16, #tpu.memory_space<vmem>>, %arg3: memref<1x288xf32, #tpu.memory_space<vmem>>, %arg4: memref<288x64xbf16, #tpu.memory_space<vmem>>, %arg5: memref<1x64xf32, #tpu.memory_space<vmem>>, %arg6: memref<1x256xf32, #tpu.memory_space<vmem>>, %arg7: memref<256x128xbf16, #tpu.memory_space<vmem>>, %arg8: memref<1x128xf32, #tpu.memory_space<vmem>>, %arg9: memref<1024x256xbf16, #tpu.memory_space<any>>, %arg10: memref<8x128xf32, #tpu.memory_space<vmem>>, %arg11: memref<1024x256xbf16, #tpu.memory_space<vmem>>, %arg12: memref<!tpu.dma_semaphore, #tpu.memory_space<semaphore_mem>>) attributes {dimension_semantics = [#tpu.dimension_semantics<arbitrary>], iteration_bounds = array<i64: 1>, scalar_prefetch = 0 : i64, scratch_operands = 2 : i64, tpu.core_type = #tpu.core_type<tc>, window_params = [{pipeline_mode = #tpu.pipeline_mode<synchronous>, transform_indices = @transform_0, window_bounds = array<i64: 128, 144>}, {pipeline_mode = #tpu.pipeline_mode<synchronous>, transform_indices = @transform_1, window_bounds = array<i64: 144, 288>}, {pipeline_mode = #tpu.pipeline_mode<synchronous>, transform_indices = @transform_2, window_bounds = array<i64: 1, 288>}, {pipeline_mode = #tpu.pipeline_mode<synchronous>, transform_indices = @transform_3, window_bounds = array<i64: 288, 64>}, {pipeline_mode = #tpu.pipeline_mode<synchronous>, transform_indices = @transform_4, window_bounds = array<i64: 1, 64>}, {pipeline_mode = #tpu.pipeline_mode<synchronous>, transform_indices = @transform_5, window_bounds = array<i64: 1, 256>}, {pipeline_mode = #tpu.pipeline_mode<synchronous>, transform_indices = @transform_6, window_bounds = array<i64: 256, 128>}, {pipeline_mode = #tpu.pipeline_mode<synchronous>, transform_indices = @transform_7, window_bounds = array<i64: 1, 128>}, {}, {pipeline_mode = #tpu.pipeline_mode<synchronous>, transform_indices = @transform_9, window_bounds = array<i64: 8, 128>}]} {
    tpu.enqueue_dma source(%arg9 : memref<1024x256xbf16, #tpu.memory_space<any>>) target(%arg11 : memref<1024x256xbf16, #tpu.memory_space<vmem>>) target_semaphore(%arg12 : memref<!tpu.dma_semaphore, #tpu.memory_space<semaphore_mem>>)
    %c0 = arith.constant 0 : index
    %c0_0 = arith.constant 0 : index
    %0 = vector.load %arg1[%c0, %c0_0] : memref<128x144xbf16, #tpu.memory_space<vmem>>, vector<128x144xbf16>
    %c0_1 = arith.constant 0 : index
    %c0_2 = arith.constant 0 : index
    %1 = vector.load %arg2[%c0_1, %c0_2] : memref<144x288xbf16, #tpu.memory_space<vmem>>, vector<144x288xbf16>
    %cst = arith.constant dense<0.000000e+00> : vector<128x288xf32>
    %2 = tpu.matmul %0, %1, %cst {dimension_numbers = #tpu.dot_dimension_numbers<[1], [0], [0], [1], [0, 0, 1, 1], [], []>} : vector<128x144xbf16>, vector<144x288xbf16>, vector<128x288xf32> -> vector<128x288xf32>
    %c0_3 = arith.constant 0 : index
    %c0_4 = arith.constant 0 : index
    %3 = vector.load %arg3[%c0_3, %c0_4] : memref<1x288xf32, #tpu.memory_space<vmem>>, vector<1x288xf32>
    %4 = vector.broadcast %3 : vector<1x288xf32> to vector<128x288xf32>
    %5 = arith.addf %2, %4 : vector<128x288xf32>
    %cst_5 = arith.constant 0.000000e+00 : f32
    %6 = vector.broadcast %cst_5 : f32 to vector<128x288xf32>
    %7 = arith.maximumf %5, %6 : vector<128x288xf32>
    %8 = arith.truncf %7 : vector<128x288xf32> to vector<128x288xbf16>
    %c0_6 = arith.constant 0 : index
    %c0_7 = arith.constant 0 : index
    %9 = vector.load %arg4[%c0_6, %c0_7] : memref<288x64xbf16, #tpu.memory_space<vmem>>, vector<288x64xbf16>
    %cst_8 = arith.constant dense<0.000000e+00> : vector<128x64xf32>
    %10 = tpu.matmul %8, %9, %cst_8 {dimension_numbers = #tpu.dot_dimension_numbers<[1], [0], [0], [1], [0, 0, 1, 1], [], []>} : vector<128x288xbf16>, vector<288x64xbf16>, vector<128x64xf32> -> vector<128x64xf32>
    %c0_9 = arith.constant 0 : index
    %c0_10 = arith.constant 0 : index
    %11 = vector.load %arg5[%c0_9, %c0_10] : memref<1x64xf32, #tpu.memory_space<vmem>>, vector<1x64xf32>
    %12 = vector.broadcast %11 : vector<1x64xf32> to vector<128x64xf32>
    %13 = arith.addf %10, %12 : vector<128x64xf32>
    %cst_11 = arith.constant 0.000000e+00 : f32
    %14 = vector.broadcast %cst_11 : f32 to vector<128x64xf32>
    %15 = arith.maximumf %13, %14 : vector<128x64xf32>
    %16 = vector.extract_strided_slice %15 {offsets = [0, 0], sizes = [8, 64], strides = [1, 1]} : vector<128x64xf32> to vector<8x64xf32>
    %17 = vector.extract_strided_slice %15 {offsets = [8, 0], sizes = [8, 64], strides = [1, 1]} : vector<128x64xf32> to vector<8x64xf32>
    %18 = vector.extract_strided_slice %15 {offsets = [16, 0], sizes = [8, 64], strides = [1, 1]} : vector<128x64xf32> to vector<8x64xf32>
    %19 = vector.extract_strided_slice %15 {offsets = [24, 0], sizes = [8, 64], strides = [1, 1]} : vector<128x64xf32> to vector<8x64xf32>
    %20 = vector.extract_strided_slice %15 {offsets = [32, 0], sizes = [8, 64], strides = [1, 1]} : vector<128x64xf32> to vector<8x64xf32>
    %21 = vector.extract_strided_slice %15 {offsets = [40, 0], sizes = [8, 64], strides = [1, 1]} : vector<128x64xf32> to vector<8x64xf32>
    %22 = vector.extract_strided_slice %15 {offsets = [48, 0], sizes = [8, 64], strides = [1, 1]} : vector<128x64xf32> to vector<8x64xf32>
    %23 = vector.extract_strided_slice %15 {offsets = [56, 0], sizes = [8, 64], strides = [1, 1]} : vector<128x64xf32> to vector<8x64xf32>
    %24 = vector.extract_strided_slice %15 {offsets = [64, 0], sizes = [8, 64], strides = [1, 1]} : vector<128x64xf32> to vector<8x64xf32>
    %25 = vector.extract_strided_slice %15 {offsets = [72, 0], sizes = [8, 64], strides = [1, 1]} : vector<128x64xf32> to vector<8x64xf32>
    %26 = vector.extract_strided_slice %15 {offsets = [80, 0], sizes = [8, 64], strides = [1, 1]} : vector<128x64xf32> to vector<8x64xf32>
    %27 = vector.extract_strided_slice %15 {offsets = [88, 0], sizes = [8, 64], strides = [1, 1]} : vector<128x64xf32> to vector<8x64xf32>
    %28 = vector.extract_strided_slice %15 {offsets = [96, 0], sizes = [8, 64], strides = [1, 1]} : vector<128x64xf32> to vector<8x64xf32>
    %29 = vector.extract_strided_slice %15 {offsets = [104, 0], sizes = [8, 64], strides = [1, 1]} : vector<128x64xf32> to vector<8x64xf32>
    %30 = vector.extract_strided_slice %15 {offsets = [112, 0], sizes = [8, 64], strides = [1, 1]} : vector<128x64xf32> to vector<8x64xf32>
    %31 = vector.extract_strided_slice %15 {offsets = [120, 0], sizes = [8, 64], strides = [1, 1]} : vector<128x64xf32> to vector<8x64xf32>
    %32 = tpu.concatenate %16, %17 in 1 : vector<8x64xf32>, vector<8x64xf32> -> vector<8x128xf32>
    %33 = tpu.concatenate %18, %19 in 1 : vector<8x64xf32>, vector<8x64xf32> -> vector<8x128xf32>
    %34 = tpu.concatenate %20, %21 in 1 : vector<8x64xf32>, vector<8x64xf32> -> vector<8x128xf32>
    %35 = tpu.concatenate %22, %23 in 1 : vector<8x64xf32>, vector<8x64xf32> -> vector<8x128xf32>
    %36 = tpu.concatenate %24, %25 in 1 : vector<8x64xf32>, vector<8x64xf32> -> vector<8x128xf32>
    %37 = tpu.concatenate %26, %27 in 1 : vector<8x64xf32>, vector<8x64xf32> -> vector<8x128xf32>
    %38 = tpu.concatenate %28, %29 in 1 : vector<8x64xf32>, vector<8x64xf32> -> vector<8x128xf32>
    %39 = tpu.concatenate %30, %31 in 1 : vector<8x64xf32>, vector<8x64xf32> -> vector<8x128xf32>
    %40 = tpu.concatenate %32, %33, %34, %35, %36, %37, %38, %39 in 1 : vector<8x128xf32>, vector<8x128xf32>, vector<8x128xf32>, vector<8x128xf32>, vector<8x128xf32>, vector<8x128xf32>, vector<8x128xf32>, vector<8x128xf32> -> vector<8x1024xf32>
    tpu.wait_dma2 semaphore(%arg12 : memref<!tpu.dma_semaphore, #tpu.memory_space<semaphore_mem>>) src(%arg9 : memref<1024x256xbf16, #tpu.memory_space<any>>) dst(%arg11 : memref<1024x256xbf16, #tpu.memory_space<vmem>>)
    %41 = arith.truncf %40 : vector<8x1024xf32> to vector<8x1024xbf16>
    %c0_12 = arith.constant 0 : index
    %c0_13 = arith.constant 0 : index
    %42 = vector.load %arg11[%c0_12, %c0_13] : memref<1024x256xbf16, #tpu.memory_space<vmem>>, vector<1024x256xbf16>
    %cst_14 = arith.constant dense<0.000000e+00> : vector<8x256xf32>
    %43 = tpu.matmul %41, %42, %cst_14 {dimension_numbers = #tpu.dot_dimension_numbers<[1], [0], [0], [1], [0, 0, 1, 1], [], []>} : vector<8x1024xbf16>, vector<1024x256xbf16>, vector<8x256xf32> -> vector<8x256xf32>
    %c0_15 = arith.constant 0 : index
    %c0_16 = arith.constant 0 : index
    %44 = vector.load %arg6[%c0_15, %c0_16] : memref<1x256xf32, #tpu.memory_space<vmem>>, vector<1x256xf32>
    %45 = vector.broadcast %44 : vector<1x256xf32> to vector<8x256xf32>
    %46 = arith.addf %43, %45 : vector<8x256xf32>
    %cst_17 = arith.constant 0.000000e+00 : f32
    %47 = vector.broadcast %cst_17 : f32 to vector<8x256xf32>
    %48 = arith.maximumf %46, %47 : vector<8x256xf32>
    %49 = arith.truncf %48 : vector<8x256xf32> to vector<8x256xbf16>
    %c0_18 = arith.constant 0 : index
    %c0_19 = arith.constant 0 : index
    %50 = vector.load %arg7[%c0_18, %c0_19] : memref<256x128xbf16, #tpu.memory_space<vmem>>, vector<256x128xbf16>
    %cst_20 = arith.constant dense<0.000000e+00> : vector<8x128xf32>
    %51 = tpu.matmul %49, %50, %cst_20 {dimension_numbers = #tpu.dot_dimension_numbers<[1], [0], [0], [1], [0, 0, 1, 1], [], []>} : vector<8x256xbf16>, vector<256x128xbf16>, vector<8x128xf32> -> vector<8x128xf32>
    %c0_21 = arith.constant 0 : index
    %c0_22 = arith.constant 0 : index
    %52 = vector.load %arg8[%c0_21, %c0_22] : memref<1x128xf32, #tpu.memory_space<vmem>>, vector<1x128xf32>
    %53 = vector.broadcast %52 : vector<1x128xf32> to vector<8x128xf32>
    %54 = arith.addf %51, %53 : vector<8x128xf32>
    %c0_23 = arith.constant 0 : index
    %c0_24 = arith.constant 0 : index
    %55 = vector.load %arg10[%c0_23, %c0_24] : memref<8x128xf32, #tpu.memory_space<vmem>>, vector<8x128xf32>
    tpu.vector_store %arg10[%c0_23, %c0_24], %54 {strides = array<i32>} : memref<8x128xf32, #tpu.memory_space<vmem>>, vector<8x128xf32>,
    return
  }
  func.func @transform_0(%arg0: i32) -> (i32, i32) {
    %c0_i32 = arith.constant 0 : i32
    %c0_i32_0 = arith.constant 0 : i32
    %c0_i32_1 = arith.constant 0 : i32
    return %c0_i32, %c0_i32_0 : i32, i32
  }
  func.func @transform_1(%arg0: i32) -> (i32, i32) {
    %c0_i32 = arith.constant 0 : i32
    %c0_i32_0 = arith.constant 0 : i32
    %c0_i32_1 = arith.constant 0 : i32
    return %c0_i32, %c0_i32_0 : i32, i32
  }
  func.func @transform_2(%arg0: i32) -> (i32, i32) {
    %c0_i32 = arith.constant 0 : i32
    %c0_i32_0 = arith.constant 0 : i32
    %c0_i32_1 = arith.constant 0 : i32
    return %c0_i32, %c0_i32_0 : i32, i32
  }
  func.func @transform_3(%arg0: i32) -> (i32, i32) {
    %c0_i32 = arith.constant 0 : i32
    %c0_i32_0 = arith.constant 0 : i32
    %c0_i32_1 = arith.constant 0 : i32
    return %c0_i32, %c0_i32_0 : i32, i32
  }
  func.func @transform_4(%arg0: i32) -> (i32, i32) {
    %c0_i32 = arith.constant 0 : i32
    %c0_i32_0 = arith.constant 0 : i32
    %c0_i32_1 = arith.constant 0 : i32
    return %c0_i32, %c0_i32_0 : i32, i32
  }
  func.func @transform_5(%arg0: i32) -> (i32, i32) {
    %c0_i32 = arith.constant 0 : i32
    %c0_i32_0 = arith.constant 0 : i32
    %c0_i32_1 = arith.constant 0 : i32
    return %c0_i32, %c0_i32_0 : i32, i32
  }
  func.func @transform_6(%arg0: i32) -> (i32, i32) {
    %c0_i32 = arith.constant 0 : i32
    %c0_i32_0 = arith.constant 0 : i32
    %c0_i32_1 = arith.constant 0 : i32
    return %c0_i32, %c0_i32_0 : i32, i32
  }
  func.func @transform_7(%arg0: i32) -> (i32, i32) {
    %c0_i32 = arith.constant 0 : i32
    %c0_i32_0 = arith.constant 0 : i32
    %c0_i32_1 = arith.constant 0 : i32
    return %c0_i32, %c0_i32_0 : i32, i32
  }
  func.func @transform_9(%arg0: i32) -> (i32, i32) {
    %c0_i32 = arith.constant 0 : i32
    %c0_i32_0 = arith.constant 0 : i32
    %c0_i32_1 = arith.constant 0 : i32
    return %c0_i32, %c0_i32_0 : i32, i32
  }
}

</mosaic_0001>

<llo_original>
// kernel: actor_critic_forward.1
$region0: #{actor_critic_forward.1}
  #allocation0 [shape = 'u32[]', space=smem, size = 0x4, offset = 0x4, fixed_abs, tag = 'smem constant byte address 0x4 - core index']
  #allocation1 [shape = 'u32[144,128]{1,0:T(1,128)}', space=vmem, size = 0x12000, scoped, tag = 'internal scratch']
  #allocation2 [shape = 'bf16[1024,256]{1,0:T(8,128)(2,1)}', space=vmem, size = 0x80000, scoped, tag = 'scratch operand']
  #allocation3 [shape = 's32[1]{0}', space=sflag, size = 0x4, scoped, tag = 'scratch operand']
  #allocation4 [shape = 's32[]', space=sflag, size = 0x4, offset = 0, fixed_abs, tag = 'sflag constant byte address 0x0 - dummy sync flag']
  %s0 = inlined_call_operand.vmem [shape: bf16[128,144], index: 0, kind: input, shape index: {}]
  %s1 = inlined_call_operand.vmem [shape: bf16[144,288], index: 1, kind: input, shape index: {}]
  %s2 = inlined_call_operand.vmem [shape: f32[1,288], index: 2, kind: input, shape index: {}]
  %s3 = inlined_call_operand.vmem [shape: bf16[288,64], index: 3, kind: input, shape index: {}]
  %s4 = inlined_call_operand.vmem [shape: f32[1,64], index: 4, kind: input, shape index: {}]
  %s5 = inlined_call_operand.vmem [shape: f32[1,256], index: 5, kind: input, shape index: {}]
  %s6 = inlined_call_operand.vmem [shape: bf16[256,128], index: 6, kind: input, shape index: {}]
  %s7 = inlined_call_operand.vmem [shape: f32[1,128], index: 7, kind: input, shape index: {}]
  %s8 = inlined_call_operand.vmem [shape: bf16[1024,256], index: 8, kind: input, shape index: {}]
  %s9 = inlined_call_operand.vmem [shape: f32[8,128], index: 9, kind: output, shape index: {}]
  %s10 = sld [smem:[#allocation0]]
  $region76: #{actor_critic_forward.1} parent=0
    _
  %s12 = ssub.s32 1, %s10
  %s13 = scalar_select 0, %s12, %s10
  // Predicated region
  $region2: #{actor_critic_forward.1} parent=0 // pred_check
    _
  $region3: #{actor_critic_forward.1} parent=0 // pred_check_branch
    %15 = sbr.rel (0) target = $region5
  $region4: #{actor_critic_forward.1} parent=0 // pred_region
    _
  $region5: #{actor_critic_forward.1} parent=0 // pred_fallthru
    _
  // Predicated region
  $region6: #{actor_critic_forward.1} parent=0 // pred_check
    _
  $region7: #{actor_critic_forward.1} parent=0 // pred_check_branch
    %17 = sbr.rel (0) target = $region9
  $region8: #{actor_critic_forward.1} parent=0 // pred_region
    _
  $region9: #{actor_critic_forward.1} parent=0 // pred_fallthru
    _
  // Predicated region
  $region10: #{actor_critic_forward.1} parent=0 // pred_check
    _
  $region11: #{actor_critic_forward.1} parent=0 // pred_check_branch
    %19 = sbr.rel (0) target = $region13
  $region12: #{actor_critic_forward.1} parent=0 // pred_region
    _
  $region13: #{actor_critic_forward.1} parent=0 // pred_fallthru
    _
  // Predicated region
  $region14: #{actor_critic_forward.1} parent=0 // pred_check
    _
  $region15: #{actor_critic_forward.1} parent=0 // pred_check_branch
    %21 = sbr.rel (0) target = $region17
  $region16: #{actor_critic_forward.1} parent=0 // pred_region
    _
  $region17: #{actor_critic_forward.1} parent=0 // pred_fallthru
    _
  // Predicated region
  $region18: #{actor_critic_forward.1} parent=0 // pred_check
    _
  $region19: #{actor_critic_forward.1} parent=0 // pred_check_branch
    %23 = sbr.rel (0) target = $region21
  $region20: #{actor_critic_forward.1} parent=0 // pred_region
    _
  $region21: #{actor_critic_forward.1} parent=0 // pred_fallthru
    _
  // Predicated region
  $region22: #{actor_critic_forward.1} parent=0 // pred_check
    _
  $region23: #{actor_critic_forward.1} parent=0 // pred_check_branch
    %25 = sbr.rel (0) target = $region25
  $region24: #{actor_critic_forward.1} parent=0 // pred_region
    _
  $region25: #{actor_critic_forward.1} parent=0 // pred_fallthru
    _
  // Predicated region
  $region26: #{actor_critic_forward.1} parent=0 // pred_check
    _
  $region27: #{actor_critic_forward.1} parent=0 // pred_check_branch
    %27 = sbr.rel (0) target = $region29
  $region28: #{actor_critic_forward.1} parent=0 // pred_region
    _
  $region29: #{actor_critic_forward.1} parent=0 // pred_fallthru
    _
  // Predicated region
  $region30: #{actor_critic_forward.1} parent=0 // pred_check
    _
  $region31: #{actor_critic_forward.1} parent=0 // pred_check_branch
    %29 = sbr.rel (0) target = $region33
  $region32: #{actor_critic_forward.1} parent=0 // pred_region
    _
  $region33: #{actor_critic_forward.1} parent=0 // pred_fallthru
    _
  %p32 = scmp.lt.u32.totalorder 1024, 8
  %p33 = pneg %p32
  // Predicated region
  $region34: #{actor_critic_forward.1} parent=0 // pred_check
    _
  $region35: #{actor_critic_forward.1} parent=0 // pred_check_branch
    %35 = sbr.rel (%p32) target = $region37
  $region36: #{actor_critic_forward.1} parent=0 // pred_region
    %s51 = sand.u32 1024, 7
    %p52 = scmp.eq.s32.totalorder %s51, 0
    // Predicated region
    $region49: #{actor_critic_forward.1} parent=36 // pred_check
      %p53 = pneg %p52
    $region50: #{actor_critic_forward.1} parent=36 // pred_check_branch
      %55 = sbr.rel (%p53) target = $region52
    $region51: #{actor_critic_forward.1} parent=36 // pred_region
      loop: start=0, step=1, limit=1
      $region53: #{actor_critic_forward.1} parent=51 // loop_pre_header
        _
      $region54: #{actor_critic_forward.1} parent=51 // loop_header
        %s57 = sphi 0, %s61
        %p58 = scmp.ge.s32.totalorder %s57, 1
        %s62 = sphi %s8, %s8
        %s63 = sphi [#allocation2], [#allocation2]
      $region55: #{actor_critic_forward.1} parent=51 // loop_header_branch
        %60 = sbr.rel (%p58) target = $region59
      $region56: #{actor_critic_forward.1} parent=51 // loop_body
        %v64 = vld [vmem:[%s62] sm:$0xff]
        %65 = vst [vmem:[%s63] sm:$0xff] %v64
        %v66 = vld [vmem:[%s62 + $0x8] sm:$0xff]
        %67 = vst [vmem:[%s63 + $0x8] sm:$0xff] %v66
        %v68 = vld [vmem:[%s62 + $0x10] sm:$0xff]
        %69 = vst [vmem:[%s63 + $0x10] sm:$0xff] %v68
        %v70 = vld [vmem:[%s62 + $0x18] sm:$0xff]
        %71 = vst [vmem:[%s63 + $0x18] sm:$0xff] %v70
        %v72 = vld [vmem:[%s62 + $0x20] sm:$0xff]
        %73 = vst [vmem:[%s63 + $0x20] sm:$0xff] %v72
        %v74 = vld [vmem:[%s62 + $0x28] sm:$0xff]
        %75 = vst [vmem:[%s63 + $0x28] sm:$0xff] %v74
        %v76 = vld [vmem:[%s62 + $0x30] sm:$0xff]
        %77 = vst [vmem:[%s63 + $0x30] sm:$0xff] %v76
        %v78 = vld [vmem:[%s62 + $0x38] sm:$0xff]
        %79 = vst [vmem:[%s63 + $0x38] sm:$0xff] %v78
        %v80 = vld [vmem:[%s62 + $0x40] sm:$0xff]
        %81 = vst [vmem:[%s63 + $0x40] sm:$0xff] %v80
        %v82 = vld [vmem:[%s62 + $0x48] sm:$0xff]
        %83 = vst [vmem:[%s63 + $0x48] sm:$0xff] %v82
        %v84 = vld [vmem:[%s62 + $0x50] sm:$0xff]
        %85 = vst [vmem:[%s63 + $0x50] sm:$0xff] %v84
        %v86 = vld [vmem:[%s62 + $0x58] sm:$0xff]
        %87 = vst [vmem:[%s63 + $0x58] sm:$0xff] %v86
        %v88 = vld [vmem:[%s62 + $0x60] sm:$0xff]
        %89 = vst [vmem:[%s63 + $0x60] sm:$0xff] %v88
        %v90 = vld [vmem:[%s62 + $0x68] sm:$0xff]
        %91 = vst [vmem:[%s63 + $0x68] sm:$0xff] %v90
        %v92 = vld [vmem:[%s62 + $0x70] sm:$0xff]
        %93 = vst [vmem:[%s63 + $0x70] sm:$0xff] %v92
        %v94 = vld [vmem:[%s62 + $0x78] sm:$0xff]
        %95 = vst [vmem:[%s63 + $0x78] sm:$0xff] %v94
        %v96 = vld [vmem:[%s62 + $0x80] sm:$0xff]
        %97 = vst [vmem:[%s63 + $0x80] sm:$0xff] %v96
        %v98 = vld [vmem:[%s62 + $0x88] sm:$0xff]
        %99 = vst [vmem:[%s63 + $0x88] sm:$0xff] %v98
        %v100 = vld [vmem:[%s62 + $0x90] sm:$0xff]
        %101 = vst [vmem:[%s63 + $0x90] sm:$0xff] %v100
        %v102 = vld [vmem:[%s62 + $0x98] sm:$0xff]
        %103 = vst [vmem:[%s63 + $0x98] sm:$0xff] %v102
        %v104 = vld [vmem:[%s62 + $0xa0] sm:$0xff]
        %105 = vst [vmem:[%s63 + $0xa0] sm:$0xff] %v104
        %v106 = vld [vmem:[%s62 + $0xa8] sm:$0xff]
        %107 = vst [vmem:[%s63 + $0xa8] sm:$0xff] %v106
        %v108 = vld [vmem:[%s62 + $0xb0] sm:$0xff]
        %109 = vst [vmem:[%s63 + $0xb0] sm:$0xff] %v108
        %v110 = vld [vmem:[%s62 + $0xb8] sm:$0xff]
        %111 = vst [vmem:[%s63 + $0xb8] sm:$0xff] %v110
        %v112 = vld [vmem:[%s62 + $0xc0] sm:$0xff]
        %113 = vst [vmem:[%s63 + $0xc0] sm:$0xff] %v112
        %v114 = vld [vmem:[%s62 + $0xc8] sm:$0xff]
        %115 = vst [vmem:[%s63 + $0xc8] sm:$0xff] %v114
        %v116 = vld [vmem:[%s62 + $0xd0] sm:$0xff]
        %117 = vst [vmem:[%s63 + $0xd0] sm:$0xff] %v116
        %v118 = vld [vmem:[%s62 + $0xd8] sm:$0xff]
        %119 = vst [vmem:[%s63 + $0xd8] sm:$0xff] %v118
        %v120 = vld [vmem:[%s62 + $0xe0] sm:$0xff]
        %121 = vst [vmem:[%s63 + $0xe0] sm:$0xff] %v120
        %v122 = vld [vmem:[%s62 + $0xe8] sm:$0xff]
        %123 = vst [vmem:[%s63 + $0xe8] sm:$0xff] %v122
        %v124 = vld [vmem:[%s62 + $0xf0] sm:$0xff]
        %125 = vst [vmem:[%s63 + $0xf0] sm:$0xff] %v124
        %v126 = vld [vmem:[%s62 + $0xf8] sm:$0xff]
        %127 = vst [vmem:[%s63 + $0xf8] sm:$0xff] %v126
        %v128 = vld [vmem:[%s62 + $0x100] sm:$0xff]
        %129 = vst [vmem:[%s63 + $0x100] sm:$0xff] %v128
        %v130 = vld [vmem:[%s62 + $0x108] sm:$0xff]
        %131 = vst [vmem:[%s63 + $0x108] sm:$0xff] %v130
        %v132 = vld [vmem:[%s62 + $0x110] sm:$0xff]
        %133 = vst [vmem:[%s63 + $0x110] sm:$0xff] %v132
        %v134 = vld [vmem:[%s62 + $0x118] sm:$0xff]
        %135 = vst [vmem:[%s63 + $0x118] sm:$0xff] %v134
        %v136 = vld [vmem:[%s62 + $0x120] sm:$0xff]
        %137 = vst [vmem:[%s63 + $0x120] sm:$0xff] %v136
        %v138 = vld [vmem:[%s62 + $0x128] sm:$0xff]
        %139 = vst [vmem:[%s63 + $0x128] sm:$0xff] %v138
        %v140 = vld [vmem:[%s62 + $0x130] sm:$0xff]
        %141 = vst [vmem:[%s63 + $0x130] sm:$0xff] %v140
        %v142 = vld [vmem:[%s62 + $0x138] sm:$0xff]
        %143 = vst [vmem:[%s63 + $0x138] sm:$0xff] %v142
        %v144 = vld [vmem:[%s62 + $0x140] sm:$0xff]
        %145 = vst [vmem:[%s63 + $0x140] sm:$0xff] %v144
        %v146 = vld [vmem:[%s62 + $0x148] sm:$0xff]
        %147 = vst [vmem:[%s63 + $0x148] sm:$0xff] %v146
        %v148 = vld [vmem:[%s62 + $0x150] sm:$0xff]
        %149 = vst [vmem:[%s63 + $0x150] sm:$0xff] %v148
        %v150 = vld [vmem:[%s62 + $0x158] sm:$0xff]
        %151 = vst [vmem:[%s63 + $0x158] sm:$0xff] %v150
        %v152 = vld [vmem:[%s62 + $0x160] sm:$0xff]
        %153 = vst [vmem:[%s63 + $0x160] sm:$0xff] %v152
        %v154 = vld [vmem:[%s62 + $0x168] sm:$0xff]
        %155 = vst [vmem:[%s63 + $0x168] sm:$0xff] %v154
        %v156 = vld [vmem:[%s62 + $0x170] sm:$0xff]
        %157 = vst [vmem:[%s63 + $0x170] sm:$0xff] %v156
        %v158 = vld [vmem:[%s62 + $0x178] sm:$0xff]
        %159 = vst [vmem:[%s63 + $0x178] sm:$0xff] %v158
        %v160 = vld [vmem:[%s62 + $0x180] sm:$0xff]
        %161 = vst [vmem:[%s63 + $0x180] sm:$0xff] %v160
        %v162 = vld [vmem:[%s62 + $0x188] sm:$0xff]
        %163 = vst [vmem:[%s63 + $0x188] sm:$0xff] %v162
        %v164 = vld [vmem:[%s62 + $0x190] sm:$0xff]
        %165 = vst [vmem:[%s63 + $0x190] sm:$0xff] %v164
        %v166 = vld [vmem:[%s62 + $0x198] sm:$0xff]
        %167 = vst [vmem:[%s63 + $0x198] sm:$0xff] %v166
        %v168 = vld [vmem:[%s62 + $0x1a0] sm:$0xff]
        %169 = vst [vmem:[%s63 + $0x1a0] sm:$0xff] %v168
        %v170 = vld [vmem:[%s62 + $0x1a8] sm:$0xff]
        %171 = vst [vmem:[%s63 + $0x1a8] sm:$0xff] %v170
        %v172 = vld [vmem:[%s62 + $0x1b0] sm:$0xff]
        %173 = vst [vmem:[%s63 + $0x1b0] sm:$0xff] %v172
        %v174 = vld [vmem:[%s62 + $0x1b8] sm:$0xff]
        %175 = vst [vmem:[%s63 + $0x1b8] sm:$0xff] %v174
        %v176 = vld [vmem:[%s62 + $0x1c0] sm:$0xff]
        %177 = vst [vmem:[%s63 + $0x1c0] sm:$0xff] %v176
        %v178 = vld [vmem:[%s62 + $0x1c8] sm:$0xff]
        %179 = vst [vmem:[%s63 + $0x1c8] sm:$0xff] %v178
        %v180 = vld [vmem:[%s62 + $0x1d0] sm:$0xff]
        %181 = vst [vmem:[%s63 + $0x1d0] sm:$0xff] %v180
        %v182 = vld [vmem:[%s62 + $0x1d8] sm:$0xff]
        %183 = vst [vmem:[%s63 + $0x1d8] sm:$0xff] %v182
        %v184 = vld [vmem:[%s62 + $0x1e0] sm:$0xff]
        %185 = vst [vmem:[%s63 + $0x1e0] sm:$0xff] %v184
        %v186 = vld [vmem:[%s62 + $0x1e8] sm:$0xff]
        %187 = vst [vmem:[%s63 + $0x1e8] sm:$0xff] %v186
        %v188 = vld [vmem:[%s62 + $0x1f0] sm:$0xff]
        %189 = vst [vmem:[%s63 + $0x1f0] sm:$0xff] %v188
        %v190 = vld [vmem:[%s62 + $0x1f8] sm:$0xff]
        %191 = vst [vmem:[%s63 + $0x1f8] sm:$0xff] %v190
        %v192 = vld [vmem:[%s62 + $0x200] sm:$0xff]
        %193 = vst [vmem:[%s63 + $0x200] sm:$0xff] %v192
        %v194 = vld [vmem:[%s62 + $0x208] sm:$0xff]
        %195 = vst [vmem:[%s63 + $0x208] sm:$0xff] %v194
        %v196 = vld [vmem:[%s62 + $0x210] sm:$0xff]
        %197 = vst [vmem:[%s63 + $0x210] sm:$0xff] %v196
        %v198 = vld [vmem:[%s62 + $0x218] sm:$0xff]
        %199 = vst [vmem:[%s63 + $0x218] sm:$0xff] %v198
        %v200 = vld [vmem:[%s62 + $0x220] sm:$0xff]
        %201 = vst [vmem:[%s63 + $0x220] sm:$0xff] %v200
        %v202 = vld [vmem:[%s62 + $0x228] sm:$0xff]
        %203 = vst [vmem:[%s63 + $0x228] sm:$0xff] %v202
        %v204 = vld [vmem:[%s62 + $0x230] sm:$0xff]
        %205 = vst [vmem:[%s63 + $0x230] sm:$0xff] %v204
        %v206 = vld [vmem:[%s62 + $0x238] sm:$0xff]
        %207 = vst [vmem:[%s63 + $0x238] sm:$0xff] %v206
        %v208 = vld [vmem:[%s62 + $0x240] sm:$0xff]
        %209 = vst [vmem:[%s63 + $0x240] sm:$0xff] %v208
        %v210 = vld [vmem:[%s62 + $0x248] sm:$0xff]
        %211 = vst [vmem:[%s63 + $0x248] sm:$0xff] %v210
        %v212 = vld [vmem:[%s62 + $0x250] sm:$0xff]
        %213 = vst [vmem:[%s63 + $0x250] sm:$0xff] %v212
        %v214 = vld [vmem:[%s62 + $0x258] sm:$0xff]
        %215 = vst [vmem:[%s63 + $0x258] sm:$0xff] %v214
        %v216 = vld [vmem:[%s62 + $0x260] sm:$0xff]
        %217 = vst [vmem:[%s63 + $0x260] sm:$0xff] %v216
        %v218 = vld [vmem:[%s62 + $0x268] sm:$0xff]
        %219 = vst [vmem:[%s63 + $0x268] sm:$0xff] %v218
        %v220 = vld [vmem:[%s62 + $0x270] sm:$0xff]
        %221 = vst [vmem:[%s63 + $0x270] sm:$0xff] %v220
        %v222 = vld [vmem:[%s62 + $0x278] sm:$0xff]
        %223 = vst [vmem:[%s63 + $0x278] sm:$0xff] %v222
        %v224 = vld [vmem:[%s62 + $0x280] sm:$0xff]
        %225 = vst [vmem:[%s63 + $0x280] sm:$0xff] %v224
        %v226 = vld [vmem:[%s62 + $0x288] sm:$0xff]
        %227 = vst [vmem:[%s63 + $0x288] sm:$0xff] %v226
        %v228 = vld [vmem:[%s62 + $0x290] sm:$0xff]
        %229 = vst [vmem:[%s63 + $0x290] sm:$0xff] %v228
        %v230 = vld [vmem:[%s62 + $0x298] sm:$0xff]
        %231 = vst [vmem:[%s63 + $0x298] sm:$0xff] %v230
        %v232 = vld [vmem:[%s62 + $0x2a0] sm:$0xff]
        %233 = vst [vmem:[%s63 + $0x2a0] sm:$0xff] %v232
        %v234 = vld [vmem:[%s62 + $0x2a8] sm:$0xff]
        %235 = vst [vmem:[%s63 + $0x2a8] sm:$0xff] %v234
        %v236 = vld [vmem:[%s62 + $0x2b0] sm:$0xff]
        %237 = vst [vmem:[%s63 + $0x2b0] sm:$0xff] %v236
        %v238 = vld [vmem:[%s62 + $0x2b8] sm:$0xff]
        %239 = vst [vmem:[%s63 + $0x2b8] sm:$0xff] %v238
        %v240 = vld [vmem:[%s62 + $0x2c0] sm:$0xff]
        %241 = vst [vmem:[%s63 + $0x2c0] sm:$0xff] %v240
        %v242 = vld [vmem:[%s62 + $0x2c8] sm:$0xff]
        %243 = vst [vmem:[%s63 + $0x2c8] sm:$0xff] %v242
        %v244 = vld [vmem:[%s62 + $0x2d0] sm:$0xff]
        %245 = vst [vmem:[%s63 + $0x2d0] sm:$0xff] %v244
        %v246 = vld [vmem:[%s62 + $0x2d8] sm:$0xff]
        %247 = vst [vmem:[%s63 + $0x2d8] sm:$0xff] %v246
        %v248 = vld [vmem:[%s62 + $0x2e0] sm:$0xff]
        %249 = vst [vmem:[%s63 + $0x2e0] sm:$0xff] %v248
        %v250 = vld [vmem:[%s62 + $0x2e8] sm:$0xff]
        %251 = vst [vmem:[%s63 + $0x2e8] sm:$0xff] %v250
        %v252 = vld [vmem:[%s62 + $0x2f0] sm:$0xff]
        %253 = vst [vmem:[%s63 + $0x2f0] sm:$0xff] %v252
        %v254 = vld [vmem:[%s62 + $0x2f8] sm:$0xff]
        %255 = vst [vmem:[%s63 + $0x2f8] sm:$0xff] %v254
        %v256 = vld [vmem:[%s62 + $0x300] sm:$0xff]
        %257 = vst [vmem:[%s63 + $0x300] sm:$0xff] %v256
        %v258 = vld [vmem:[%s62 + $0x308] sm:$0xff]
        %259 = vst [vmem:[%s63 + $0x308] sm:$0xff] %v258
        %v260 = vld [vmem:[%s62 + $0x310] sm:$0xff]
        %261 = vst [vmem:[%s63 + $0x310] sm:$0xff] %v260
        %v262 = vld [vmem:[%s62 + $0x318] sm:$0xff]
        %263 = vst [vmem:[%s63 + $0x318] sm:$0xff] %v262
        %v264 = vld [vmem:[%s62 + $0x320] sm:$0xff]
        %265 = vst [vmem:[%s63 + $0x320] sm:$0xff] %v264
        %v266 = vld [vmem:[%s62 + $0x328] sm:$0xff]
        %267 = vst [vmem:[%s63 + $0x328] sm:$0xff] %v266
        %v268 = vld [vmem:[%s62 + $0x330] sm:$0xff]
        %269 = vst [vmem:[%s63 + $0x330] sm:$0xff] %v268
        %v270 = vld [vmem:[%s62 + $0x338] sm:$0xff]
        %271 = vst [vmem:[%s63 + $0x338] sm:$0xff] %v270
        %v272 = vld [vmem:[%s62 + $0x340] sm:$0xff]
        %273 = vst [vmem:[%s63 + $0x340] sm:$0xff] %v272
        %v274 = vld [vmem:[%s62 + $0x348] sm:$0xff]
        %275 = vst [vmem:[%s63 + $0x348] sm:$0xff] %v274
        %v276 = vld [vmem:[%s62 + $0x350] sm:$0xff]
        %277 = vst [vmem:[%s63 + $0x350] sm:$0xff] %v276
        %v278 = vld [vmem:[%s62 + $0x358] sm:$0xff]
        %279 = vst [vmem:[%s63 + $0x358] sm:$0xff] %v278
        %v280 = vld [vmem:[%s62 + $0x360] sm:$0xff]
        %281 = vst [vmem:[%s63 + $0x360] sm:$0xff] %v280
        %v282 = vld [vmem:[%s62 + $0x368] sm:$0xff]
        %283 = vst [vmem:[%s63 + $0x368] sm:$0xff] %v282
        %v284 = vld [vmem:[%s62 + $0x370] sm:$0xff]
        %285 = vst [vmem:[%s63 + $0x370] sm:$0xff] %v284
        %v286 = vld [vmem:[%s62 + $0x378] sm:$0xff]
        %287 = vst [vmem:[%s63 + $0x378] sm:$0xff] %v286
        %v288 = vld [vmem:[%s62 + $0x380] sm:$0xff]
        %289 = vst [vmem:[%s63 + $0x380] sm:$0xff] %v288
        %v290 = vld [vmem:[%s62 + $0x388] sm:$0xff]
        %291 = vst [vmem:[%s63 + $0x388] sm:$0xff] %v290
        %v292 = vld [vmem:[%s62 + $0x390] sm:$0xff]
        %293 = vst [vmem:[%s63 + $0x390] sm:$0xff] %v292
        %v294 = vld [vmem:[%s62 + $0x398] sm:$0xff]
        %295 = vst [vmem:[%s63 + $0x398] sm:$0xff] %v294
        %v296 = vld [vmem:[%s62 + $0x3a0] sm:$0xff]
        %297 = vst [vmem:[%s63 + $0x3a0] sm:$0xff] %v296
        %v298 = vld [vmem:[%s62 + $0x3a8] sm:$0xff]
        %299 = vst [vmem:[%s63 + $0x3a8] sm:$0xff] %v298
        %v300 = vld [vmem:[%s62 + $0x3b0] sm:$0xff]
        %301 = vst [vmem:[%s63 + $0x3b0] sm:$0xff] %v300
        %v302 = vld [vmem:[%s62 + $0x3b8] sm:$0xff]
        %303 = vst [vmem:[%s63 + $0x3b8] sm:$0xff] %v302
        %v304 = vld [vmem:[%s62 + $0x3c0] sm:$0xff]
        %305 = vst [vmem:[%s63 + $0x3c0] sm:$0xff] %v304
        %v306 = vld [vmem:[%s62 + $0x3c8] sm:$0xff]
        %307 = vst [vmem:[%s63 + $0x3c8] sm:$0xff] %v306
        %v308 = vld [vmem:[%s62 + $0x3d0] sm:$0xff]
        %309 = vst [vmem:[%s63 + $0x3d0] sm:$0xff] %v308
        %v310 = vld [vmem:[%s62 + $0x3d8] sm:$0xff]
        %311 = vst [vmem:[%s63 + $0x3d8] sm:$0xff] %v310
        %v312 = vld [vmem:[%s62 + $0x3e0] sm:$0xff]
        %313 = vst [vmem:[%s63 + $0x3e0] sm:$0xff] %v312
        %v314 = vld [vmem:[%s62 + $0x3e8] sm:$0xff]
        %315 = vst [vmem:[%s63 + $0x3e8] sm:$0xff] %v314
        %v316 = vld [vmem:[%s62 + $0x3f0] sm:$0xff]
        %317 = vst [vmem:[%s63 + $0x3f0] sm:$0xff] %v316
        %v318 = vld [vmem:[%s62 + $0x3f8] sm:$0xff]
        %319 = vst [vmem:[%s63 + $0x3f8] sm:$0xff] %v318
      $region57: #{actor_critic_forward.1} parent=51 // loop_footer
        %s61 = sadd.s32 1, %s57
      $region58: #{actor_critic_forward.1} parent=51 // loop_footer_branch
        %56 = sbr.rel target = $region54
      $region59: #{actor_critic_forward.1} parent=51 // loop_exit
        _
    $region52: #{actor_critic_forward.1} parent=36 // pred_fallthru
      _
    %p320 = pneg %p52
    // Predicated region
    $region60: #{actor_critic_forward.1} parent=36 // pred_check
      _
    $region61: #{actor_critic_forward.1} parent=36 // pred_check_branch
      %322 = sbr.rel (%p52) target = $region63
    $region62: #{actor_critic_forward.1} parent=36 // pred_region
      %s323 = sand.u32 1024, 7
    $region63: #{actor_critic_forward.1} parent=36 // pred_fallthru
      _
  $region37: #{actor_critic_forward.1} parent=0 // pred_fallthru
    _
  // Predicated region
  $region38: #{actor_critic_forward.1} parent=0 // pred_check
    %p36 = pneg %p32
  $region39: #{actor_critic_forward.1} parent=0 // pred_check_branch
    %38 = sbr.rel (%p36) target = $region41
  $region40: #{actor_critic_forward.1} parent=0 // pred_region
    %s39 = sshll.u32 1, 1024
    %s40 = ssub.s32 %s39, 1
    loop: start=0, step=1, limit=1
    $region42: #{actor_critic_forward.1} parent=40 // loop_pre_header
      _
    $region43: #{actor_critic_forward.1} parent=40 // loop_header
      %s42 = sphi 0, %s46
      %p43 = scmp.ge.s32.totalorder %s42, 1
      %s47 = sphi %s8, %s8
      %s48 = sphi [#allocation2], [#allocation2]
    $region44: #{actor_critic_forward.1} parent=40 // loop_header_branch
      %45 = sbr.rel (%p43) target = $region48
    $region45: #{actor_critic_forward.1} parent=40 // loop_body
      %v49 = vld [vmem:[%s47] sm:%s40]
      %50 = vst [vmem:[%s48] sm:%s40] %v49
    $region46: #{actor_critic_forward.1} parent=40 // loop_footer
      %s46 = sadd.s32 1, %s42
    $region47: #{actor_critic_forward.1} parent=40 // loop_footer_branch
      %41 = sbr.rel target = $region43
    $region48: #{actor_critic_forward.1} parent=40 // loop_exit
      _
  $region41: #{actor_critic_forward.1} parent=0 // pred_fallthru
    _
  // Predicated region
  $region64: #{actor_critic_forward.1} parent=0 // pred_check
    _
  $region65: #{actor_critic_forward.1} parent=0 // pred_check_branch
    %326 = sbr.rel (0) target = $region67
  $region66: #{actor_critic_forward.1} parent=0 // pred_region
    %327 = vsyncadd [#allocation3], 16384
  $region67: #{actor_critic_forward.1} parent=0 // pred_fallthru
    _
  %v328 = vld [vmem:[%s0] sm:$0xff]
  %v329 = vld [vmem:[%s0 + $0x8] sm:$0xff]
  %v330 = vld [vmem:[%s0 + $0x10] sm:$0xff]
  %v331 = vld [vmem:[%s0 + $0x18] sm:$0xff]
  %v332 = vld [vmem:[%s0 + $0x20] sm:$0xff]
  %v333 = vld [vmem:[%s0 + $0x28] sm:$0xff]
  %v334 = vld [vmem:[%s0 + $0x30] sm:$0xff]
  %v335 = vld [vmem:[%s0 + $0x38] sm:$0xff]
  %v336 = vld [vmem:[%s0 + $0x40] sm:$0xff]
  %v337 = vld [vmem:[%s0 + $0x48] sm:$0xff]
  %v338 = vld [vmem:[%s0 + $0x50] sm:$0xff]
  %v339 = vld [vmem:[%s0 + $0x58] sm:$0xff]
  %v340 = vld [vmem:[%s0 + $0x60] sm:$0xff]
  %v341 = vld [vmem:[%s0 + $0x68] sm:$0xff]
  %v342 = vld [vmem:[%s0 + $0x70] sm:$0xff]
  %v343 = vld [vmem:[%s0 + $0x78] sm:$0xff]
  %v344 = vld [vmem:[%s1] sm:$0xff]
  %v345 = vld [vmem:[%s1 + $0x8] sm:$0xf]
  %v346 = vld [vmem:[%s1 + $0xc] sm:$0xff]
  %v347 = vld [vmem:[%s1 + $0x14] sm:$0xf]
  %v348 = vld [vmem:[%s1 + $0x18] sm:$0xff]
  %v349 = vld [vmem:[%s1 + $0x20] sm:$0xf]
  %v350 = vld [vmem:[%s1 + $0x24] sm:$0xff]
  %v351 = vld [vmem:[%s1 + $0x2c] sm:$0xf]
  %v352 = vld [vmem:[%s1 + $0x30] sm:$0xff]
  %v353 = vld [vmem:[%s1 + $0x38] sm:$0xf]
  %v354 = vld [vmem:[%s1 + $0x3c] sm:$0xff]
  %v355 = vld [vmem:[%s1 + $0x44] sm:$0xf]
  %v356 = vld [vmem:[%s1 + $0x48] sm:$0xff]
  %v357 = vld [vmem:[%s1 + $0x50] sm:$0xf]
  %v358 = vld [vmem:[%s1 + $0x54] sm:$0xff]
  %v359 = vld [vmem:[%s1 + $0x5c] sm:$0xf]
  %v360 = vld [vmem:[%s1 + $0x60] sm:$0xff]
  %v361 = vld [vmem:[%s1 + $0x68] sm:$0xf]
  %v362 = vld [vmem:[%s1 + $0x6c] sm:$0xff]
  %v363 = vld [vmem:[%s1 + $0x74] sm:$0xf]
  %v364 = vld [vmem:[%s1 + $0x78] sm:$0xff]
  %v365 = vld [vmem:[%s1 + $0x80] sm:$0xf]
  %v366 = vld [vmem:[%s1 + $0x84] sm:$0xff]
  %v367 = vld [vmem:[%s1 + $0x8c] sm:$0xf]
  %v368 = vld [vmem:[%s1 + $0x90] sm:$0xff]
  %v369 = vld [vmem:[%s1 + $0x98] sm:$0xf]
  %v370 = vld [vmem:[%s1 + $0x9c] sm:$0xff]
  %v371 = vld [vmem:[%s1 + $0xa4] sm:$0xf]
  %v372 = vld [vmem:[%s1 + $0xa8] sm:$0xff]
  %v373 = vld [vmem:[%s1 + $0xb0] sm:$0xf]
  %v374 = vld [vmem:[%s1 + $0xb4] sm:$0xff]
  %v375 = vld [vmem:[%s1 + $0xbc] sm:$0xf]
  %v376 = vld [vmem:[%s1 + $0xc0] sm:$0xff]
  %v377 = vld [vmem:[%s1 + $0xc8] sm:$0xf]
  %v378 = vld [vmem:[%s1 + $0xcc] sm:$0xff]
  %v379 = vld [vmem:[%s1 + $0xd4] sm:$0xf]
  %v380 = vld [vmem:[%s2] sm:$0x7]
  %v382 = vlaneseq
  %v383 = vshrl.u32 %v382, 7
  %v384 = vsub.s32 0, %v383
  %v385 = vrot.slane %v380, %v384
  %v386 = vlaneseq
  %v387 = vshrl.u32 %v386, 7
  %v388 = vsub.s32 1, %v387
  %v389 = vrot.slane %v380, %v388
  %v390 = vlaneseq
  %v391 = vshrl.u32 %v390, 7
  %v392 = vsub.s32 2, %v391
  %v393 = vrot.slane %v380, %v392
  %v413 = vunpack.c.l.b16 %v328
  %v414 = vunpack.c.h.b16 %v328
  %v415 = vunpack.c.l.b16 %v329
  %v416 = vunpack.c.h.b16 %v329
  %v417 = vunpack.c.l.b16 %v330
  %v418 = vunpack.c.h.b16 %v330
  %v419 = vunpack.c.l.b16 %v331
  %v420 = vunpack.c.h.b16 %v331
  %v421 = vunpack.c.l.b16 %v332
  %v422 = vunpack.c.h.b16 %v332
  %v423 = vunpack.c.l.b16 %v333
  %v424 = vunpack.c.h.b16 %v333
  %v425 = vunpack.c.l.b16 %v334
  %v426 = vunpack.c.h.b16 %v334
  %v427 = vunpack.c.l.b16 %v335
  %v428 = vunpack.c.h.b16 %v335
  %v429 = vunpack.c.l.b16 %v336
  %v430 = vunpack.c.h.b16 %v336
  %v431 = vunpack.c.l.b16 %v337
  %v432 = vunpack.c.h.b16 %v337
  %v433 = vunpack.c.l.b16 %v338
  %v434 = vunpack.c.h.b16 %v338
  %v435 = vunpack.c.l.b16 %v339
  %v436 = vunpack.c.h.b16 %v339
  %v437 = vunpack.c.l.b16 %v340
  %v438 = vunpack.c.h.b16 %v340
  %v439 = vunpack.c.l.b16 %v341
  %v440 = vunpack.c.h.b16 %v341
  %v441 = vunpack.c.l.b16 %v342
  %v442 = vunpack.c.h.b16 %v342
  %v443 = vunpack.c.l.b16 %v343
  %v444 = vunpack.c.h.b16 %v343
  %v445 = vpack.c.b16 %v415, %v413
  %v446 = vpack.c.b16 %v416, %v414
  %v447 = vpack.c.b16 %v419, %v417
  %v448 = vpack.c.b16 %v420, %v418
  %v449 = vpack.c.b16 %v423, %v421
  %v450 = vpack.c.b16 %v424, %v422
  %v451 = vpack.c.b16 %v427, %v425
  %v452 = vpack.c.b16 %v428, %v426
  %v453 = vpack.c.b16 %v431, %v429
  %v454 = vpack.c.b16 %v432, %v430
  %v455 = vpack.c.b16 %v435, %v433
  %v456 = vpack.c.b16 %v436, %v434
  %v457 = vpack.c.b16 %v439, %v437
  %v458 = vpack.c.b16 %v440, %v438
  %v459 = vpack.c.b16 %v443, %v441
  %v460 = vpack.c.b16 %v444, %v442
  %v505 = vunpack.c.l.b16 %v344
  %v506 = vunpack.c.h.b16 %v344
  %v507 = vunpack.c.l.b16 %v345
  %v508 = vunpack.c.l.b16 %v346
  %v509 = vunpack.c.h.b16 %v346
  %v510 = vunpack.c.l.b16 %v347
  %v511 = vunpack.c.l.b16 %v348
  %v512 = vunpack.c.h.b16 %v348
  %v513 = vunpack.c.l.b16 %v349
  %v514 = vunpack.c.l.b16 %v350
  %v515 = vunpack.c.h.b16 %v350
  %v516 = vunpack.c.l.b16 %v351
  %v517 = vunpack.c.l.b16 %v352
  %v518 = vunpack.c.h.b16 %v352
  %v519 = vunpack.c.l.b16 %v353
  %v520 = vunpack.c.l.b16 %v354
  %v521 = vunpack.c.h.b16 %v354
  %v522 = vunpack.c.l.b16 %v355
  %v523 = vunpack.c.l.b16 %v356
  %v524 = vunpack.c.h.b16 %v356
  %v525 = vunpack.c.l.b16 %v357
  %v526 = vunpack.c.l.b16 %v358
  %v527 = vunpack.c.h.b16 %v358
  %v528 = vunpack.c.l.b16 %v359
  %v529 = vunpack.c.l.b16 %v360
  %v530 = vunpack.c.h.b16 %v360
  %v531 = vunpack.c.l.b16 %v361
  %v532 = vunpack.c.l.b16 %v362
  %v533 = vunpack.c.h.b16 %v362
  %v534 = vunpack.c.l.b16 %v363
  %v535 = vunpack.c.l.b16 %v364
  %v536 = vunpack.c.h.b16 %v364
  %v537 = vunpack.c.l.b16 %v365
  %v538 = vunpack.c.l.b16 %v366
  %v539 = vunpack.c.h.b16 %v366
  %v540 = vunpack.c.l.b16 %v367
  %v541 = vunpack.c.l.b16 %v368
  %v542 = vunpack.c.h.b16 %v368
  %v543 = vunpack.c.l.b16 %v369
  %v544 = vunpack.c.l.b16 %v370
  %v545 = vunpack.c.h.b16 %v370
  %v546 = vunpack.c.l.b16 %v371
  %v547 = vunpack.c.l.b16 %v372
  %v548 = vunpack.c.h.b16 %v372
  %v549 = vunpack.c.l.b16 %v373
  %v550 = vunpack.c.l.b16 %v374
  %v551 = vunpack.c.h.b16 %v374
  %v552 = vunpack.c.l.b16 %v375
  %v553 = vunpack.c.l.b16 %v376
  %v554 = vunpack.c.h.b16 %v376
  %v555 = vunpack.c.l.b16 %v377
  %v556 = vunpack.c.l.b16 %v378
  %v557 = vunpack.c.h.b16 %v378
  %v558 = vunpack.c.l.b16 %v379
  %v559 = vpack.c.b16 %v508, %v505
  %v560 = vpack.c.b16 %v509, %v506
  %v561 = vpack.c.b16 %v510, %v507
  %v562 = vpack.c.b16 %v514, %v511
  %v563 = vpack.c.b16 %v515, %v512
  %v564 = vpack.c.b16 %v516, %v513
  %v565 = vpack.c.b16 %v520, %v517
  %v566 = vpack.c.b16 %v521, %v518
  %v567 = vpack.c.b16 %v522, %v519
  %v568 = vpack.c.b16 %v526, %v523
  %v569 = vpack.c.b16 %v527, %v524
  %v570 = vpack.c.b16 %v528, %v525
  %v571 = vpack.c.b16 %v532, %v529
  %v572 = vpack.c.b16 %v533, %v530
  %v573 = vpack.c.b16 %v534, %v531
  %v574 = vpack.c.b16 %v538, %v535
  %v575 = vpack.c.b16 %v539, %v536
  %v576 = vpack.c.b16 %v540, %v537
  %v577 = vpack.c.b16 %v544, %v541
  %v578 = vpack.c.b16 %v545, %v542
  %v579 = vpack.c.b16 %v546, %v543
  %v580 = vpack.c.b16 %v550, %v547
  %v581 = vpack.c.b16 %v551, %v548
  %v582 = vpack.c.b16 %v552, %v549
  %v583 = vpack.c.b16 %v556, %v553
  %v584 = vpack.c.b16 %v557, %v554
  %v585 = vpack.c.b16 %v558, %v555
  %vm613 = vcmask 130048
  %v615 = vsel %vm613, %v446, 0
  %v618 = vsel %vm613, %v448, 0
  %v621 = vsel %vm613, %v450, 0
  %v624 = vsel %vm613, %v452, 0
  %v627 = vsel %vm613, %v454, 0
  %v630 = vsel %vm613, %v456, 0
  %v633 = vsel %vm613, %v458, 0
  %v636 = vsel %vm613, %v460, 0
  %638 = vmatprep.subr.bf16.mxu0 %v581
  %639 = vmatpush1.bf16.msra.mxu0 %v580
  %640 = vmatprep.subr.bf16.mxu0 %v578
  %641 = vmatpush1.bf16.msra.mxu0 %v577
  %642 = vmatprep.subr.bf16.mxu0 %v575
  %643 = vmatpush1.bf16.msra.mxu0 %v574
  %644 = vmatprep.subr.bf16.mxu0 %v572
  %645 = vmatpush1.bf16.msra.mxu0 %v571
  %646 = vmatprep.subr.bf16.mxu0 %v569
  %647 = vmatpush1.bf16.msra.mxu0 %v568
  %648 = vmatprep.subr.bf16.mxu0 %v566
  %649 = vmatpush1.bf16.msra.mxu0 %v565
  %650 = vmatprep.subr.bf16.mxu0 %v563
  %651 = vmatpush1.bf16.msra.mxu0 %v562
  %652 = vmatprep.subr.bf16.mxu0 %v560
  %653 = vmatpush1.bf16.msra.mxu0 %v559
  %654 = vmatprep.subr.bf16.mxu0 0
  %655 = vmatpush2.bf16.msra.mxu0 0
  %656 = vmatprep.subr.bf16.mxu0 0
  %657 = vmatpush2.bf16.msra.mxu0 0
  %658 = vmatprep.subr.bf16.mxu0 0
  %659 = vmatpush2.bf16.msra.mxu0 0
  %660 = vmatprep.subr.bf16.mxu0 0
  %661 = vmatpush2.bf16.msra.mxu0 0
  %662 = vmatprep.subr.bf16.mxu0 0
  %663 = vmatpush2.bf16.msra.mxu0 0
  %664 = vmatprep.subr.bf16.mxu0 0
  %665 = vmatpush2.bf16.msra.mxu0 0
  %666 = vmatprep.subr.bf16.mxu0 0
  %667 = vmatpush2.bf16.msra.mxu0 0
  %668 = vmatprep.subr.bf16.mxu0 %v584
  %669 = vmatpush2.bf16.msra.mxu0 %v583
  %670 = vmatprep.mubr.bf16.mxu0 %v615
  %671 = vmatmul.mubr.bf16.gmra.mxu0 %v445
  %v672 = vpop.f32.mrf.mxu0
  %v673 = vadd.f32 %v385, %v672
  %v674 = vpop.f32.mrf.mxu0
  %v675 = vadd.f32 %v389, %v674
  %v676 = vpop.f32.mrf.mxu0
  %v677 = vadd.f32 %v385, %v676
  %v678 = vpop.f32.mrf.mxu0
  %v679 = vadd.f32 %v389, %v678
  %680 = vmatprep.mubr.bf16.mxu0 %v618
  %681 = vmatmul.mubr.bf16.gmra.mxu0 %v447
  %v682 = vpop.f32.mrf.mxu0
  %v683 = vadd.f32 %v385, %v682
  %v684 = vpop.f32.mrf.mxu0
  %v685 = vadd.f32 %v389, %v684
  %v686 = vpop.f32.mrf.mxu0
  %v687 = vadd.f32 %v385, %v686
  %v688 = vpop.f32.mrf.mxu0
  %v689 = vadd.f32 %v389, %v688
  %690 = vmatprep.mubr.bf16.mxu0 %v621
  %691 = vmatmul.mubr.bf16.gmra.mxu0 %v449
  %v692 = vpop.f32.mrf.mxu0
  %v693 = vadd.f32 %v385, %v692
  %v694 = vpop.f32.mrf.mxu0
  %v695 = vadd.f32 %v389, %v694
  %v696 = vpop.f32.mrf.mxu0
  %v697 = vadd.f32 %v385, %v696
  %v698 = vpop.f32.mrf.mxu0
  %v699 = vadd.f32 %v389, %v698
  %700 = vmatprep.mubr.bf16.mxu0 %v624
  %701 = vmatmul.mubr.bf16.gmra.mxu0 %v451
  %v702 = vpop.f32.mrf.mxu0
  %v703 = vadd.f32 %v385, %v702
  %v704 = vpop.f32.mrf.mxu0
  %v705 = vadd.f32 %v389, %v704
  %v706 = vpop.f32.mrf.mxu0
  %v707 = vadd.f32 %v385, %v706
  %v708 = vpop.f32.mrf.mxu0
  %v709 = vadd.f32 %v389, %v708
  %710 = vmatprep.mubr.bf16.mxu0 %v627
  %711 = vmatmul.mubr.bf16.gmra.mxu0 %v453
  %v712 = vpop.f32.mrf.mxu0
  %v713 = vadd.f32 %v385, %v712
  %v714 = vpop.f32.mrf.mxu0
  %v715 = vadd.f32 %v389, %v714
  %v716 = vpop.f32.mrf.mxu0
  %v717 = vadd.f32 %v385, %v716
  %v718 = vpop.f32.mrf.mxu0
  %v719 = vadd.f32 %v389, %v718
  %720 = vmatprep.mubr.bf16.mxu0 %v630
  %721 = vmatmul.mubr.bf16.gmra.mxu0 %v455
  %v722 = vpop.f32.mrf.mxu0
  %v723 = vadd.f32 %v385, %v722
  %v724 = vpop.f32.mrf.mxu0
  %v725 = vadd.f32 %v389, %v724
  %v726 = vpop.f32.mrf.mxu0
  %v727 = vadd.f32 %v385, %v726
  %v728 = vpop.f32.mrf.mxu0
  %v729 = vadd.f32 %v389, %v728
  %730 = vmatprep.mubr.bf16.mxu0 %v633
  %731 = vmatmul.mubr.bf16.gmra.mxu0 %v457
  %v732 = vpop.f32.mrf.mxu0
  %v733 = vadd.f32 %v385, %v732
  %v734 = vpop.f32.mrf.mxu0
  %v735 = vadd.f32 %v389, %v734
  %v736 = vpop.f32.mrf.mxu0
  %v737 = vadd.f32 %v385, %v736
  %v738 = vpop.f32.mrf.mxu0
  %v739 = vadd.f32 %v389, %v738
  %740 = vmatprep.mubr.bf16.mxu0 %v636
  %741 = vmatmul.mubr.bf16.gmra.mxu0 %v459
  %v742 = vpop.f32.mrf.mxu0
  %v743 = vadd.f32 %v385, %v742
  %v744 = vpop.f32.mrf.mxu0
  %v745 = vadd.f32 %v389, %v744
  %v746 = vpop.f32.mrf.mxu0
  %v747 = vadd.f32 %v385, %v746
  %v748 = vpop.f32.mrf.mxu0
  %v749 = vadd.f32 %v389, %v748
  %750 = vdwg.mxu0
  %751 = vmatprep.subr.bf16.mxu0 0
  %752 = vmatpush1.bf16.msra.mxu0 %v582
  %753 = vmatprep.subr.bf16.mxu0 0
  %754 = vmatpush1.bf16.msra.mxu0 %v579
  %755 = vmatprep.subr.bf16.mxu0 0
  %756 = vmatpush1.bf16.msra.mxu0 %v576
  %757 = vmatprep.subr.bf16.mxu0 0
  %758 = vmatpush1.bf16.msra.mxu0 %v573
  %759 = vmatprep.subr.bf16.mxu0 0
  %760 = vmatpush1.bf16.msra.mxu0 %v570
  %761 = vmatprep.subr.bf16.mxu0 0
  %762 = vmatpush1.bf16.msra.mxu0 %v567
  %763 = vmatprep.subr.bf16.mxu0 0
  %764 = vmatpush1.bf16.msra.mxu0 %v564
  %765 = vmatprep.subr.bf16.mxu0 0
  %766 = vmatpush1.bf16.msra.mxu0 %v561
  %767 = vmatprep.subr.bf16.mxu0 0
  %768 = vmatpush2.bf16.msra.mxu0 0
  %769 = vmatprep.subr.bf16.mxu0 0
  %770 = vmatpush2.bf16.msra.mxu0 0
  %771 = vmatprep.subr.bf16.mxu0 0
  %772 = vmatpush2.bf16.msra.mxu0 0
  %773 = vmatprep.subr.bf16.mxu0 0
  %774 = vmatpush2.bf16.msra.mxu0 0
  %775 = vmatprep.subr.bf16.mxu0 0
  %776 = vmatpush2.bf16.msra.mxu0 0
  %777 = vmatprep.subr.bf16.mxu0 0
  %778 = vmatpush2.bf16.msra.mxu0 0
  %779 = vmatprep.subr.bf16.mxu0 0
  %780 = vmatpush2.bf16.msra.mxu0 0
  %781 = vmatprep.subr.bf16.mxu0 0
  %782 = vmatpush2.bf16.msra.mxu0 %v585
  %783 = vmatprep.mubr.bf16.mxu0 %v615
  %784 = vmatmul.mubr.bf16.gmra.mxu0 %v445
  %v785 = vpop.f32.mrf.mxu0
  %v786 = vadd.f32 %v393, %v785
  %v787 = vpop.f32.mrf.mxu0
  %v788 = vpop.f32.mrf.mxu0
  %v789 = vadd.f32 %v393, %v788
  %v790 = vpop.f32.mrf.mxu0
  %791 = vmatprep.mubr.bf16.mxu0 %v618
  %792 = vmatmul.mubr.bf16.gmra.mxu0 %v447
  %v793 = vpop.f32.mrf.mxu0
  %v794 = vadd.f32 %v393, %v793
  %v795 = vpop.f32.mrf.mxu0
  %v796 = vpop.f32.mrf.mxu0
  %v797 = vadd.f32 %v393, %v796
  %v798 = vpop.f32.mrf.mxu0
  %799 = vmatprep.mubr.bf16.mxu0 %v621
  %800 = vmatmul.mubr.bf16.gmra.mxu0 %v449
  %v801 = vpop.f32.mrf.mxu0
  %v802 = vadd.f32 %v393, %v801
  %v803 = vpop.f32.mrf.mxu0
  %v804 = vpop.f32.mrf.mxu0
  %v805 = vadd.f32 %v393, %v804
  %v806 = vpop.f32.mrf.mxu0
  %807 = vmatprep.mubr.bf16.mxu0 %v624
  %808 = vmatmul.mubr.bf16.gmra.mxu0 %v451
  %v809 = vpop.f32.mrf.mxu0
  %v810 = vadd.f32 %v393, %v809
  %v811 = vpop.f32.mrf.mxu0
  %v812 = vpop.f32.mrf.mxu0
  %v813 = vadd.f32 %v393, %v812
  %v814 = vpop.f32.mrf.mxu0
  %815 = vmatprep.mubr.bf16.mxu0 %v627
  %816 = vmatmul.mubr.bf16.gmra.mxu0 %v453
  %v817 = vpop.f32.mrf.mxu0
  %v818 = vadd.f32 %v393, %v817
  %v819 = vpop.f32.mrf.mxu0
  %v820 = vpop.f32.mrf.mxu0
  %v821 = vadd.f32 %v393, %v820
  %v822 = vpop.f32.mrf.mxu0
  %823 = vmatprep.mubr.bf16.mxu0 %v630
  %824 = vmatmul.mubr.bf16.gmra.mxu0 %v455
  %v825 = vpop.f32.mrf.mxu0
  %v826 = vadd.f32 %v393, %v825
  %v827 = vpop.f32.mrf.mxu0
  %v828 = vpop.f32.mrf.mxu0
  %v829 = vadd.f32 %v393, %v828
  %v830 = vpop.f32.mrf.mxu0
  %831 = vmatprep.mubr.bf16.mxu0 %v633
  %832 = vmatmul.mubr.bf16.gmra.mxu0 %v457
  %v833 = vpop.f32.mrf.mxu0
  %v834 = vadd.f32 %v393, %v833
  %v835 = vpop.f32.mrf.mxu0
  %v836 = vpop.f32.mrf.mxu0
  %v837 = vadd.f32 %v393, %v836
  %v838 = vpop.f32.mrf.mxu0
  %839 = vmatprep.mubr.bf16.mxu0 %v636
  %840 = vmatmul.mubr.bf16.gmra.mxu0 %v459
  %v841 = vpop.f32.mrf.mxu0
  %v842 = vadd.f32 %v393, %v841
  %v843 = vpop.f32.mrf.mxu0
  %v844 = vpop.f32.mrf.mxu0
  %v845 = vadd.f32 %v393, %v844
  %v846 = vpop.f32.mrf.mxu0
  %847 = vdwg.mxu0
  %v848 = vmax.f32 %v673, 0.0
  %v849 = vmax.f32 %v675, 0.0
  %v850 = vmax.f32 %v786, 0.0
  %v851 = vmax.f32 %v677, 0.0
  %v852 = vmax.f32 %v679, 0.0
  %v853 = vmax.f32 %v789, 0.0
  %v854 = vmax.f32 %v683, 0.0
  %v855 = vmax.f32 %v685, 0.0
  %v856 = vmax.f32 %v794, 0.0
  %v857 = vmax.f32 %v687, 0.0
  %v858 = vmax.f32 %v689, 0.0
  %v859 = vmax.f32 %v797, 0.0
  %v860 = vmax.f32 %v693, 0.0
  %v861 = vmax.f32 %v695, 0.0
  %v862 = vmax.f32 %v802, 0.0
  %v863 = vmax.f32 %v697, 0.0
  %v864 = vmax.f32 %v699, 0.0
  %v865 = vmax.f32 %v805, 0.0
  %v866 = vmax.f32 %v703, 0.0
  %v867 = vmax.f32 %v705, 0.0
  %v868 = vmax.f32 %v810, 0.0
  %v869 = vmax.f32 %v707, 0.0
  %v870 = vmax.f32 %v709, 0.0
  %v871 = vmax.f32 %v813, 0.0
  %v872 = vmax.f32 %v713, 0.0
  %v873 = vmax.f32 %v715, 0.0
  %v874 = vmax.f32 %v818, 0.0
  %v875 = vmax.f32 %v717, 0.0
  %v876 = vmax.f32 %v719, 0.0
  %v877 = vmax.f32 %v821, 0.0
  %v878 = vmax.f32 %v723, 0.0
  %v879 = vmax.f32 %v725, 0.0
  %v880 = vmax.f32 %v826, 0.0
  %v881 = vmax.f32 %v727, 0.0
  %v882 = vmax.f32 %v729, 0.0
  %v883 = vmax.f32 %v829, 0.0
  %v884 = vmax.f32 %v733, 0.0
  %v885 = vmax.f32 %v735, 0.0
  %v886 = vmax.f32 %v834, 0.0
  %v887 = vmax.f32 %v737, 0.0
  %v888 = vmax.f32 %v739, 0.0
  %v889 = vmax.f32 %v837, 0.0
  %v890 = vmax.f32 %v743, 0.0
  %v891 = vmax.f32 %v745, 0.0
  %v892 = vmax.f32 %v842, 0.0
  %v893 = vmax.f32 %v747, 0.0
  %v894 = vmax.f32 %v749, 0.0
  %v895 = vmax.f32 %v845, 0.0
  %v896 = vpack.c.bf16 %v851, %v848
  %v897 = vpack.c.bf16 %v852, %v849
  %v898 = vpack.c.bf16 %v853, %v850
  %v899 = vpack.c.bf16 %v857, %v854
  %v900 = vpack.c.bf16 %v858, %v855
  %v901 = vpack.c.bf16 %v859, %v856
  %v902 = vpack.c.bf16 %v863, %v860
  %v903 = vpack.c.bf16 %v864, %v861
  %v904 = vpack.c.bf16 %v865, %v862
  %v905 = vpack.c.bf16 %v869, %v866
  %v906 = vpack.c.bf16 %v870, %v867
  %v907 = vpack.c.bf16 %v871, %v868
  %v908 = vpack.c.bf16 %v875, %v872
  %v909 = vpack.c.bf16 %v876, %v873
  %v910 = vpack.c.bf16 %v877, %v874
  %v911 = vpack.c.bf16 %v881, %v878
  %v912 = vpack.c.bf16 %v882, %v879
  %v913 = vpack.c.bf16 %v883, %v880
  %v914 = vpack.c.bf16 %v887, %v884
  %v915 = vpack.c.bf16 %v888, %v885
  %v916 = vpack.c.bf16 %v889, %v886
  %v917 = vpack.c.bf16 %v893, %v890
  %v918 = vpack.c.bf16 %v894, %v891
  %v919 = vpack.c.bf16 %v895, %v892
  %v920 = vld [vmem:[%s3] sm:$0xf]
  %v921 = vld [vmem:[%s3 + $0x4] sm:$0xf]
  %v922 = vld [vmem:[%s3 + $0x8] sm:$0xf]
  %v923 = vld [vmem:[%s3 + $0xc] sm:$0xf]
  %v924 = vld [vmem:[%s3 + $0x10] sm:$0xf]
  %v925 = vld [vmem:[%s3 + $0x14] sm:$0xf]
  %v926 = vld [vmem:[%s3 + $0x18] sm:$0xf]
  %v927 = vld [vmem:[%s3 + $0x1c] sm:$0xf]
  %v928 = vld [vmem:[%s3 + $0x20] sm:$0xf]
  %v929 = vld [vmem:[%s3 + $0x24] sm:$0xf]
  %v930 = vld [vmem:[%s3 + $0x28] sm:$0xf]
  %v931 = vld [vmem:[%s3 + $0x2c] sm:$0xf]
  %v932 = vld [vmem:[%s3 + $0x30] sm:$0xf]
  %v933 = vld [vmem:[%s3 + $0x34] sm:$0xf]
  %v934 = vld [vmem:[%s3 + $0x38] sm:$0xf]
  %v935 = vld [vmem:[%s3 + $0x3c] sm:$0xf]
  %v936 = vld [vmem:[%s3 + $0x40] sm:$0xf]
  %v937 = vld [vmem:[%s3 + $0x44] sm:$0xf]
  %v938 = vld [vmem:[%s3 + $0x48] sm:$0xf]
  %v939 = vld [vmem:[%s3 + $0x4c] sm:$0xf]
  %v940 = vld [vmem:[%s3 + $0x50] sm:$0xf]
  %v941 = vld [vmem:[%s3 + $0x54] sm:$0xf]
  %v942 = vld [vmem:[%s3 + $0x58] sm:$0xf]
  %v943 = vld [vmem:[%s3 + $0x5c] sm:$0xf]
  %v944 = vld [vmem:[%s3 + $0x60] sm:$0xf]
  %v945 = vld [vmem:[%s3 + $0x64] sm:$0xf]
  %v946 = vld [vmem:[%s3 + $0x68] sm:$0xf]
  %v947 = vld [vmem:[%s3 + $0x6c] sm:$0xf]
  %v948 = vld [vmem:[%s3 + $0x70] sm:$0xf]
  %v949 = vld [vmem:[%s3 + $0x74] sm:$0xf]
  %v950 = vld [vmem:[%s3 + $0x78] sm:$0xf]
  %v951 = vld [vmem:[%s3 + $0x7c] sm:$0xf]
  %v952 = vld [vmem:[%s3 + $0x80] sm:$0xf]
  %v953 = vld [vmem:[%s3 + $0x84] sm:$0xf]
  %v954 = vld [vmem:[%s3 + $0x88] sm:$0xf]
  %v955 = vld [vmem:[%s3 + $0x8c] sm:$0xf]
  %v956 = vld [vmem:[%s4] sm:$0x1]
  %v958 = vlaneseq
  %v959 = vshrl.u32 %v958, 7
  %v960 = vsub.s32 0, %v959
  %v961 = vrot.slane %v956, %v960
  %v999 = vunpack.c.l.b16 %v920
  %v1000 = vunpack.c.l.b16 %v921
  %v1001 = vunpack.c.l.b16 %v922
  %v1002 = vunpack.c.l.b16 %v923
  %v1003 = vunpack.c.l.b16 %v924
  %v1004 = vunpack.c.l.b16 %v925
  %v1005 = vunpack.c.l.b16 %v926
  %v1006 = vunpack.c.l.b16 %v927
  %v1007 = vunpack.c.l.b16 %v928
  %v1008 = vunpack.c.l.b16 %v929
  %v1009 = vunpack.c.l.b16 %v930
  %v1010 = vunpack.c.l.b16 %v931
  %v1011 = vunpack.c.l.b16 %v932
  %v1012 = vunpack.c.l.b16 %v933
  %v1013 = vunpack.c.l.b16 %v934
  %v1014 = vunpack.c.l.b16 %v935
  %v1015 = vunpack.c.l.b16 %v936
  %v1016 = vunpack.c.l.b16 %v937
  %v1017 = vunpack.c.l.b16 %v938
  %v1018 = vunpack.c.l.b16 %v939
  %v1019 = vunpack.c.l.b16 %v940
  %v1020 = vunpack.c.l.b16 %v941
  %v1021 = vunpack.c.l.b16 %v942
  %v1022 = vunpack.c.l.b16 %v943
  %v1023 = vunpack.c.l.b16 %v944
  %v1024 = vunpack.c.l.b16 %v945
  %v1025 = vunpack.c.l.b16 %v946
  %v1026 = vunpack.c.l.b16 %v947
  %v1027 = vunpack.c.l.b16 %v948
  %v1028 = vunpack.c.l.b16 %v949
  %v1029 = vunpack.c.l.b16 %v950
  %v1030 = vunpack.c.l.b16 %v951
  %v1031 = vunpack.c.l.b16 %v952
  %v1032 = vunpack.c.l.b16 %v953
  %v1033 = vunpack.c.l.b16 %v954
  %v1034 = vunpack.c.l.b16 %v955
  %v1035 = vpack.c.b16 %v1000, %v999
  %v1036 = vpack.c.b16 %v1002, %v1001
  %v1037 = vpack.c.b16 %v1004, %v1003
  %v1038 = vpack.c.b16 %v1006, %v1005
  %v1039 = vpack.c.b16 %v1008, %v1007
  %v1040 = vpack.c.b16 %v1010, %v1009
  %v1041 = vpack.c.b16 %v1012, %v1011
  %v1042 = vpack.c.b16 %v1014, %v1013
  %v1043 = vpack.c.b16 %v1016, %v1015
  %v1044 = vpack.c.b16 %v1018, %v1017
  %v1045 = vpack.c.b16 %v1020, %v1019
  %v1046 = vpack.c.b16 %v1022, %v1021
  %v1047 = vpack.c.b16 %v1024, %v1023
  %v1048 = vpack.c.b16 %v1026, %v1025
  %v1049 = vpack.c.b16 %v1028, %v1027
  %v1050 = vpack.c.b16 %v1030, %v1029
  %v1051 = vpack.c.b16 %v1032, %v1031
  %v1052 = vpack.c.b16 %v1034, %v1033
  %vm1071 = vcmask 261120
  %v1073 = vsel %vm1071, %v898, 0
  %v1076 = vsel %vm1071, %v901, 0
  %v1079 = vsel %vm1071, %v904, 0
  %v1082 = vsel %vm1071, %v907, 0
  %v1085 = vsel %vm1071, %v910, 0
  %v1088 = vsel %vm1071, %v913, 0
  %v1091 = vsel %vm1071, %v916, 0
  %v1094 = vsel %vm1071, %v919, 0
  %1096 = vmatprep.subr.bf16.mxu0 0
  %1097 = vmatpush1.bf16.msra.mxu0 %v1042
  %1098 = vmatprep.subr.bf16.mxu0 0
  %1099 = vmatpush1.bf16.msra.mxu0 %v1041
  %1100 = vmatprep.subr.bf16.mxu0 0
  %1101 = vmatpush1.bf16.msra.mxu0 %v1040
  %1102 = vmatprep.subr.bf16.mxu0 0
  %1103 = vmatpush1.bf16.msra.mxu0 %v1039
  %1104 = vmatprep.subr.bf16.mxu0 0
  %1105 = vmatpush1.bf16.msra.mxu0 %v1038
  %1106 = vmatprep.subr.bf16.mxu0 0
  %1107 = vmatpush1.bf16.msra.mxu0 %v1037
  %1108 = vmatprep.subr.bf16.mxu0 0
  %1109 = vmatpush1.bf16.msra.mxu0 %v1036
  %1110 = vmatprep.subr.bf16.mxu0 0
  %1111 = vmatpush1.bf16.msra.mxu0 %v1035
  %1112 = vmatprep.subr.bf16.mxu0 0
  %1113 = vmatpush2.bf16.msra.mxu0 %v1050
  %1114 = vmatprep.subr.bf16.mxu0 0
  %1115 = vmatpush2.bf16.msra.mxu0 %v1049
  %1116 = vmatprep.subr.bf16.mxu0 0
  %1117 = vmatpush2.bf16.msra.mxu0 %v1048
  %1118 = vmatprep.subr.bf16.mxu0 0
  %1119 = vmatpush2.bf16.msra.mxu0 %v1047
  %1120 = vmatprep.subr.bf16.mxu0 0
  %1121 = vmatpush2.bf16.msra.mxu0 %v1046
  %1122 = vmatprep.subr.bf16.mxu0 0
  %1123 = vmatpush2.bf16.msra.mxu0 %v1045
  %1124 = vmatprep.subr.bf16.mxu0 0
  %1125 = vmatpush2.bf16.msra.mxu0 %v1044
  %1126 = vmatprep.subr.bf16.mxu0 0
  %1127 = vmatpush2.bf16.msra.mxu0 %v1043
  %1128 = vmatprep.mubr.bf16.mxu0 %v897
  %1129 = vmatmul.mubr.bf16.gmra.mxu0 %v896
  %v1130 = vpop.f32.mrf.mxu0
  %v1131 = vadd.f32 %v961, %v1130
  %v1132 = vpop.f32.mrf.mxu0
  %v1133 = vpop.f32.mrf.mxu0
  %v1134 = vadd.f32 %v961, %v1133
  %v1135 = vpop.f32.mrf.mxu0
  %1136 = vmatprep.mubr.bf16.mxu0 %v900
  %1137 = vmatmul.mubr.bf16.gmra.mxu0 %v899
  %v1138 = vpop.f32.mrf.mxu0
  %v1139 = vadd.f32 %v961, %v1138
  %v1140 = vpop.f32.mrf.mxu0
  %v1141 = vpop.f32.mrf.mxu0
  %v1142 = vadd.f32 %v961, %v1141
  %v1143 = vpop.f32.mrf.mxu0
  %1144 = vmatprep.mubr.bf16.mxu0 %v903
  %1145 = vmatmul.mubr.bf16.gmra.mxu0 %v902
  %v1146 = vpop.f32.mrf.mxu0
  %v1147 = vadd.f32 %v961, %v1146
  %v1148 = vpop.f32.mrf.mxu0
  %v1149 = vpop.f32.mrf.mxu0
  %v1150 = vadd.f32 %v961, %v1149
  %v1151 = vpop.f32.mrf.mxu0
  %1152 = vmatprep.mubr.bf16.mxu0 %v906
  %1153 = vmatmul.mubr.bf16.gmra.mxu0 %v905
  %v1154 = vpop.f32.mrf.mxu0
  %v1155 = vadd.f32 %v961, %v1154
  %v1156 = vpop.f32.mrf.mxu0
  %v1157 = vpop.f32.mrf.mxu0
  %v1158 = vadd.f32 %v961, %v1157
  %v1159 = vpop.f32.mrf.mxu0
  %1160 = vmatprep.mubr.bf16.mxu0 %v909
  %1161 = vmatmul.mubr.bf16.gmra.mxu0 %v908
  %v1162 = vpop.f32.mrf.mxu0
  %v1163 = vadd.f32 %v961, %v1162
  %v1164 = vpop.f32.mrf.mxu0
  %v1165 = vpop.f32.mrf.mxu0
  %v1166 = vadd.f32 %v961, %v1165
  %v1167 = vpop.f32.mrf.mxu0
  %1168 = vmatprep.mubr.bf16.mxu0 %v912
  %1169 = vmatmul.mubr.bf16.gmra.mxu0 %v911
  %v1170 = vpop.f32.mrf.mxu0
  %v1171 = vadd.f32 %v961, %v1170
  %v1172 = vpop.f32.mrf.mxu0
  %v1173 = vpop.f32.mrf.mxu0
  %v1174 = vadd.f32 %v961, %v1173
  %v1175 = vpop.f32.mrf.mxu0
  %1176 = vmatprep.mubr.bf16.mxu0 %v915
  %1177 = vmatmul.mubr.bf16.gmra.mxu0 %v914
  %v1178 = vpop.f32.mrf.mxu0
  %v1179 = vadd.f32 %v961, %v1178
  %v1180 = vpop.f32.mrf.mxu0
  %v1181 = vpop.f32.mrf.mxu0
  %v1182 = vadd.f32 %v961, %v1181
  %v1183 = vpop.f32.mrf.mxu0
  %1184 = vmatprep.mubr.bf16.mxu0 %v918
  %1185 = vmatmul.mubr.bf16.gmra.mxu0 %v917
  %v1186 = vpop.f32.mrf.mxu0
  %v1187 = vadd.f32 %v961, %v1186
  %v1188 = vpop.f32.mrf.mxu0
  %v1189 = vpop.f32.mrf.mxu0
  %v1190 = vadd.f32 %v961, %v1189
  %v1191 = vpop.f32.mrf.mxu0
  %1192 = vdwg.mxu0
  %1193 = vmatprep.subr.bf16.mxu0 0
  %1194 = vmatpush1.bf16.msra.mxu0 0
  %1195 = vmatprep.subr.bf16.mxu0 0
  %1196 = vmatpush1.bf16.msra.mxu0 0
  %1197 = vmatprep.subr.bf16.mxu0 0
  %1198 = vmatpush1.bf16.msra.mxu0 0
  %1199 = vmatprep.subr.bf16.mxu0 0
  %1200 = vmatpush1.bf16.msra.mxu0 0
  %1201 = vmatprep.subr.bf16.mxu0 0
  %1202 = vmatpush1.bf16.msra.mxu0 0
  %1203 = vmatprep.subr.bf16.mxu0 0
  %1204 = vmatpush1.bf16.msra.mxu0 0
  %1205 = vmatprep.subr.bf16.mxu0 0
  %1206 = vmatpush1.bf16.msra.mxu0 %v1052
  %1207 = vmatprep.subr.bf16.mxu0 0
  %1208 = vmatpush1.bf16.msra.mxu0 %v1051
  %1209 = vmatprep.subr.bf16.mxu0 0
  %1210 = vmatpush2.bf16.msra.mxu0 0
  %1211 = vmatprep.subr.bf16.mxu0 0
  %1212 = vmatpush2.bf16.msra.mxu0 0
  %1213 = vmatprep.subr.bf16.mxu0 0
  %1214 = vmatpush2.bf16.msra.mxu0 0
  %1215 = vmatprep.subr.bf16.mxu0 0
  %1216 = vmatpush2.bf16.msra.mxu0 0
  %1217 = vmatprep.subr.bf16.mxu0 0
  %1218 = vmatpush2.bf16.msra.mxu0 0
  %1219 = vmatprep.subr.bf16.mxu0 0
  %1220 = vmatpush2.bf16.msra.mxu0 0
  %1221 = vmatprep.subr.bf16.mxu0 0
  %1222 = vmatpush2.bf16.msra.mxu0 0
  %1223 = vmatprep.subr.bf16.mxu0 0
  %1224 = vmatpush2.bf16.msra.mxu0 0
  %1225 = vmatprep.mubr.bf16.mxu0 0
  %1226 = vmatmul.mubr.bf16.gmra.mxu0 %v1073
  %v1227 = vpop.f32.mrf.mxu0
  %v1228 = vadd.f32 %v1131, %v1227
  %v1229 = vpop.f32.mrf.mxu0
  %v1230 = vpop.f32.mrf.mxu0
  %v1231 = vadd.f32 %v1134, %v1230
  %v1232 = vpop.f32.mrf.mxu0
  %1233 = vmatprep.mubr.bf16.mxu0 0
  %1234 = vmatmul.mubr.bf16.gmra.mxu0 %v1076
  %v1235 = vpop.f32.mrf.mxu0
  %v1236 = vadd.f32 %v1139, %v1235
  %v1237 = vpop.f32.mrf.mxu0
  %v1238 = vpop.f32.mrf.mxu0
  %v1239 = vadd.f32 %v1142, %v1238
  %v1240 = vpop.f32.mrf.mxu0
  %1241 = vmatprep.mubr.bf16.mxu0 0
  %1242 = vmatmul.mubr.bf16.gmra.mxu0 %v1079
  %v1243 = vpop.f32.mrf.mxu0
  %v1244 = vadd.f32 %v1147, %v1243
  %v1245 = vpop.f32.mrf.mxu0
  %v1246 = vpop.f32.mrf.mxu0
  %v1247 = vadd.f32 %v1150, %v1246
  %v1248 = vpop.f32.mrf.mxu0
  %1249 = vmatprep.mubr.bf16.mxu0 0
  %1250 = vmatmul.mubr.bf16.gmra.mxu0 %v1082
  %v1251 = vpop.f32.mrf.mxu0
  %v1252 = vadd.f32 %v1155, %v1251
  %v1253 = vpop.f32.mrf.mxu0
  %v1254 = vpop.f32.mrf.mxu0
  %v1255 = vadd.f32 %v1158, %v1254
  %v1256 = vpop.f32.mrf.mxu0
  %1257 = vmatprep.mubr.bf16.mxu0 0
  %1258 = vmatmul.mubr.bf16.gmra.mxu0 %v1085
  %v1259 = vpop.f32.mrf.mxu0
  %v1260 = vadd.f32 %v1163, %v1259
  %v1261 = vpop.f32.mrf.mxu0
  %v1262 = vpop.f32.mrf.mxu0
  %v1263 = vadd.f32 %v1166, %v1262
  %v1264 = vpop.f32.mrf.mxu0
  %1265 = vmatprep.mubr.bf16.mxu0 0
  %1266 = vmatmul.mubr.bf16.gmra.mxu0 %v1088
  %v1267 = vpop.f32.mrf.mxu0
  %v1268 = vadd.f32 %v1171, %v1267
  %v1269 = vpop.f32.mrf.mxu0
  %v1270 = vpop.f32.mrf.mxu0
  %v1271 = vadd.f32 %v1174, %v1270
  %v1272 = vpop.f32.mrf.mxu0
  %1273 = vmatprep.mubr.bf16.mxu0 0
  %1274 = vmatmul.mubr.bf16.gmra.mxu0 %v1091
  %v1275 = vpop.f32.mrf.mxu0
  %v1276 = vadd.f32 %v1179, %v1275
  %v1277 = vpop.f32.mrf.mxu0
  %v1278 = vpop.f32.mrf.mxu0
  %v1279 = vadd.f32 %v1182, %v1278
  %v1280 = vpop.f32.mrf.mxu0
  %1281 = vmatprep.mubr.bf16.mxu0 0
  %1282 = vmatmul.mubr.bf16.gmra.mxu0 %v1094
  %v1283 = vpop.f32.mrf.mxu0
  %v1284 = vadd.f32 %v1187, %v1283
  %v1285 = vpop.f32.mrf.mxu0
  %v1286 = vpop.f32.mrf.mxu0
  %v1287 = vadd.f32 %v1190, %v1286
  %v1288 = vpop.f32.mrf.mxu0
  %1289 = vdwg.mxu0
  %v1290 = vmax.f32 %v1228, 0.0
  %v1291 = vmax.f32 %v1231, 0.0
  %v1292 = vmax.f32 %v1236, 0.0
  %v1293 = vmax.f32 %v1239, 0.0
  %v1294 = vmax.f32 %v1244, 0.0
  %v1295 = vmax.f32 %v1247, 0.0
  %v1296 = vmax.f32 %v1252, 0.0
  %v1297 = vmax.f32 %v1255, 0.0
  %v1298 = vmax.f32 %v1260, 0.0
  %v1299 = vmax.f32 %v1263, 0.0
  %v1300 = vmax.f32 %v1268, 0.0
  %v1301 = vmax.f32 %v1271, 0.0
  %v1302 = vmax.f32 %v1276, 0.0
  %v1303 = vmax.f32 %v1279, 0.0
  %v1304 = vmax.f32 %v1284, 0.0
  %v1305 = vmax.f32 %v1287, 0.0
  %1307 = vrot.lane.b32.xlu0 %v1291, 64
  %v1308 = vpop.permute.xlu0 %1307
  %vm1310 = vcmask 523264
  %v1311 = vsel %vm1310, %v1290, %v1308
  %1313 = vrot.lane.b32.xlu0 %v1293, 64
  %v1314 = vpop.permute.xlu0 %1313
  %v1316 = vsel %vm1310, %v1292, %v1314
  %1318 = vrot.lane.b32.xlu0 %v1295, 64
  %v1319 = vpop.permute.xlu0 %1318
  %v1321 = vsel %vm1310, %v1294, %v1319
  %1323 = vrot.lane.b32.xlu0 %v1297, 64
  %v1324 = vpop.permute.xlu0 %1323
  %v1326 = vsel %vm1310, %v1296, %v1324
  %1328 = vrot.lane.b32.xlu0 %v1299, 64
  %v1329 = vpop.permute.xlu0 %1328
  %v1331 = vsel %vm1310, %v1298, %v1329
  %1333 = vrot.lane.b32.xlu0 %v1301, 64
  %v1334 = vpop.permute.xlu0 %1333
  %v1336 = vsel %vm1310, %v1300, %v1334
  %1338 = vrot.lane.b32.xlu0 %v1303, 64
  %v1339 = vpop.permute.xlu0 %1338
  %v1341 = vsel %vm1310, %v1302, %v1339
  %1343 = vrot.lane.b32.xlu0 %v1305, 64
  %v1344 = vpop.permute.xlu0 %1343
  %v1346 = vsel %vm1310, %v1304, %v1344
  %s1347 = smul.u32 4, 128
  %s1348 = smul.u32 %s1347, 2
  %s1349 = sshll.u32 %s1348, 4
  %1350 = dma.done [#allocation3], %s1349
  %v1351 = vpack.c.bf16 %v1311, %v1311
  %v1352 = vpack.c.bf16 %v1316, %v1316
  %v1353 = vpack.c.bf16 %v1321, %v1321
  %v1354 = vpack.c.bf16 %v1326, %v1326
  %v1355 = vpack.c.bf16 %v1331, %v1331
  %v1356 = vpack.c.bf16 %v1336, %v1336
  %v1357 = vpack.c.bf16 %v1341, %v1341
  %v1358 = vpack.c.bf16 %v1346, %v1346
  %v1359 = vld [vmem:[#allocation2] sm:$0xff]
  %v1360 = vld [vmem:[#allocation2 + $0x8] sm:$0xff]
  %v1361 = vld [vmem:[#allocation2 + $0x10] sm:$0xff]
  %v1362 = vld [vmem:[#allocation2 + $0x18] sm:$0xff]
  %v1363 = vld [vmem:[#allocation2 + $0x20] sm:$0xff]
  %v1364 = vld [vmem:[#allocation2 + $0x28] sm:$0xff]
  %v1365 = vld [vmem:[#allocation2 + $0x30] sm:$0xff]
  %v1366 = vld [vmem:[#allocation2 + $0x38] sm:$0xff]
  %v1367 = vld [vmem:[#allocation2 + $0x40] sm:$0xff]
  %v1368 = vld [vmem:[#allocation2 + $0x48] sm:$0xff]
  %v1369 = vld [vmem:[#allocation2 + $0x50] sm:$0xff]
  %v1370 = vld [vmem:[#allocation2 + $0x58] sm:$0xff]
  %v1371 = vld [vmem:[#allocation2 + $0x60] sm:$0xff]
  %v1372 = vld [vmem:[#allocation2 + $0x68] sm:$0xff]
  %v1373 = vld [vmem:[#allocation2 + $0x70] sm:$0xff]
  %v1374 = vld [vmem:[#allocation2 + $0x78] sm:$0xff]
  %v1375 = vld [vmem:[#allocation2 + $0x80] sm:$0xff]
  %v1376 = vld [vmem:[#allocation2 + $0x88] sm:$0xff]
  %v1377 = vld [vmem:[#allocation2 + $0x90] sm:$0xff]
  %v1378 = vld [vmem:[#allocation2 + $0x98] sm:$0xff]
  %v1379 = vld [vmem:[#allocation2 + $0xa0] sm:$0xff]
  %v1380 = vld [vmem:[#allocation2 + $0xa8] sm:$0xff]
  %v1381 = vld [vmem:[#allocation2 + $0xb0] sm:$0xff]
  %v1382 = vld [vmem:[#allocation2 + $0xb8] sm:$0xff]
  %v1383 = vld [vmem:[#allocation2 + $0xc0] sm:$0xff]
  %v1384 = vld [vmem:[#allocation2 + $0xc8] sm:$0xff]
  %v1385 = vld [vmem:[#allocation2 + $0xd0] sm:$0xff]
  %v1386 = vld [vmem:[#allocation2 + $0xd8] sm:$0xff]
  %v1387 = vld [vmem:[#allocation2 + $0xe0] sm:$0xff]
  %v1388 = vld [vmem:[#allocation2 + $0xe8] sm:$0xff]
  %v1389 = vld [vmem:[#allocation2 + $0xf0] sm:$0xff]
  %v1390 = vld [vmem:[#allocation2 + $0xf8] sm:$0xff]
  %v1391 = vld [vmem:[#allocation2 + $0x100] sm:$0xff]
  %v1392 = vld [vmem:[#allocation2 + $0x108] sm:$0xff]
  %v1393 = vld [vmem:[#allocation2 + $0x110] sm:$0xff]
  %v1394 = vld [vmem:[#allocation2 + $0x118] sm:$0xff]
  %v1395 = vld [vmem:[#allocation2 + $0x120] sm:$0xff]
  %v1396 = vld [vmem:[#allocation2 + $0x128] sm:$0xff]
  %v1397 = vld [vmem:[#allocation2 + $0x130] sm:$0xff]
  %v1398 = vld [vmem:[#allocation2 + $0x138] sm:$0xff]
  %v1399 = vld [vmem:[#allocation2 + $0x140] sm:$0xff]
  %v1400 = vld [vmem:[#allocation2 + $0x148] sm:$0xff]
  %v1401 = vld [vmem:[#allocation2 + $0x150] sm:$0xff]
  %v1402 = vld [vmem:[#allocation2 + $0x158] sm:$0xff]
  %v1403 = vld [vmem:[#allocation2 + $0x160] sm:$0xff]
  %v1404 = vld [vmem:[#allocation2 + $0x168] sm:$0xff]
  %v1405 = vld [vmem:[#allocation2 + $0x170] sm:$0xff]
  %v1406 = vld [vmem:[#allocation2 + $0x178] sm:$0xff]
  %v1407 = vld [vmem:[#allocation2 + $0x180] sm:$0xff]
  %v1408 = vld [vmem:[#allocation2 + $0x188] sm:$0xff]
  %v1409 = vld [vmem:[#allocation2 + $0x190] sm:$0xff]
  %v1410 = vld [vmem:[#allocation2 + $0x198] sm:$0xff]
  %v1411 = vld [vmem:[#allocation2 + $0x1a0] sm:$0xff]
  %v1412 = vld [vmem:[#allocation2 + $0x1a8] sm:$0xff]
  %v1413 = vld [vmem:[#allocation2 + $0x1b0] sm:$0xff]
  %v1414 = vld [vmem:[#allocation2 + $0x1b8] sm:$0xff]
  %v1415 = vld [vmem:[#allocation2 + $0x1c0] sm:$0xff]
  %v1416 = vld [vmem:[#allocation2 + $0x1c8] sm:$0xff]
  %v1417 = vld [vmem:[#allocation2 + $0x1d0] sm:$0xff]
  %v1418 = vld [vmem:[#allocation2 + $0x1d8] sm:$0xff]
  %v1419 = vld [vmem:[#allocation2 + $0x1e0] sm:$0xff]
  %v1420 = vld [vmem:[#allocation2 + $0x1e8] sm:$0xff]
  %v1421 = vld [vmem:[#allocation2 + $0x1f0] sm:$0xff]
  %v1422 = vld [vmem:[#allocation2 + $0x1f8] sm:$0xff]
  %v1423 = vld [vmem:[#allocation2 + $0x200] sm:$0xff]
  %v1424 = vld [vmem:[#allocation2 + $0x208] sm:$0xff]
  %v1425 = vld [vmem:[#allocation2 + $0x210] sm:$0xff]
  %v1426 = vld [vmem:[#allocation2 + $0x218] sm:$0xff]
  %v1427 = vld [vmem:[#allocation2 + $0x220] sm:$0xff]
  %v1428 = vld [vmem:[#allocation2 + $0x228] sm:$0xff]
  %v1429 = vld [vmem:[#allocation2 + $0x230] sm:$0xff]
  %v1430 = vld [vmem:[#allocation2 + $0x238] sm:$0xff]
  %v1431 = vld [vmem:[#allocation2 + $0x240] sm:$0xff]
  %v1432 = vld [vmem:[#allocation2 + $0x248] sm:$0xff]
  %v1433 = vld [vmem:[#allocation2 + $0x250] sm:$0xff]
  %v1434 = vld [vmem:[#allocation2 + $0x258] sm:$0xff]
  %v1435 = vld [vmem:[#allocation2 + $0x260] sm:$0xff]
  %v1436 = vld [vmem:[#allocation2 + $0x268] sm:$0xff]
  %v1437 = vld [vmem:[#allocation2 + $0x270] sm:$0xff]
  %v1438 = vld [vmem:[#allocation2 + $0x278] sm:$0xff]
  %v1439 = vld [vmem:[#allocation2 + $0x280] sm:$0xff]
  %v1440 = vld [vmem:[#allocation2 + $0x288] sm:$0xff]
  %v1441 = vld [vmem:[#allocation2 + $0x290] sm:$0xff]
  %v1442 = vld [vmem:[#allocation2 + $0x298] sm:$0xff]
  %v1443 = vld [vmem:[#allocation2 + $0x2a0] sm:$0xff]
  %v1444 = vld [vmem:[#allocation2 + $0x2a8] sm:$0xff]
  %v1445 = vld [vmem:[#allocation2 + $0x2b0] sm:$0xff]
  %v1446 = vld [vmem:[#allocation2 + $0x2b8] sm:$0xff]
  %v1447 = vld [vmem:[#allocation2 + $0x2c0] sm:$0xff]
  %v1448 = vld [vmem:[#allocation2 + $0x2c8] sm:$0xff]
  %v1449 = vld [vmem:[#allocation2 + $0x2d0] sm:$0xff]
  %v1450 = vld [vmem:[#allocation2 + $0x2d8] sm:$0xff]
  %v1451 = vld [vmem:[#allocation2 + $0x2e0] sm:$0xff]
  %v1452 = vld [vmem:[#allocation2 + $0x2e8] sm:$0xff]
  %v1453 = vld [vmem:[#allocation2 + $0x2f0] sm:$0xff]
  %v1454 = vld [vmem:[#allocation2 + $0x2f8] sm:$0xff]
  %v1455 = vld [vmem:[#allocation2 + $0x300] sm:$0xff]
  %v1456 = vld [vmem:[#allocation2 + $0x308] sm:$0xff]
  %v1457 = vld [vmem:[#allocation2 + $0x310] sm:$0xff]
  %v1458 = vld [vmem:[#allocation2 + $0x318] sm:$0xff]
  %v1459 = vld [vmem:[#allocation2 + $0x320] sm:$0xff]
  %v1460 = vld [vmem:[#allocation2 + $0x328] sm:$0xff]
  %v1461 = vld [vmem:[#allocation2 + $0x330] sm:$0xff]
  %v1462 = vld [vmem:[#allocation2 + $0x338] sm:$0xff]
  %v1463 = vld [vmem:[#allocation2 + $0x340] sm:$0xff]
  %v1464 = vld [vmem:[#allocation2 + $0x348] sm:$0xff]
  %v1465 = vld [vmem:[#allocation2 + $0x350] sm:$0xff]
  %v1466 = vld [vmem:[#allocation2 + $0x358] sm:$0xff]
  %v1467 = vld [vmem:[#allocation2 + $0x360] sm:$0xff]
  %v1468 = vld [vmem:[#allocation2 + $0x368] sm:$0xff]
  %v1469 = vld [vmem:[#allocation2 + $0x370] sm:$0xff]
  %v1470 = vld [vmem:[#allocation2 + $0x378] sm:$0xff]
  %v1471 = vld [vmem:[#allocation2 + $0x380] sm:$0xff]
  %v1472 = vld [vmem:[#allocation2 + $0x388] sm:$0xff]
  %v1473 = vld [vmem:[#allocation2 + $0x390] sm:$0xff]
  %v1474 = vld [vmem:[#allocation2 + $0x398] sm:$0xff]
  %v1475 = vld [vmem:[#allocation2 + $0x3a0] sm:$0xff]
  %v1476 = vld [vmem:[#allocation2 + $0x3a8] sm:$0xff]
  %v1477 = vld [vmem:[#allocation2 + $0x3b0] sm:$0xff]
  %v1478 = vld [vmem:[#allocation2 + $0x3b8] sm:$0xff]
  %v1479 = vld [vmem:[#allocation2 + $0x3c0] sm:$0xff]
  %v1480 = vld [vmem:[#allocation2 + $0x3c8] sm:$0xff]
  %v1481 = vld [vmem:[#allocation2 + $0x3d0] sm:$0xff]
  %v1482 = vld [vmem:[#allocation2 + $0x3d8] sm:$0xff]
  %v1483 = vld [vmem:[#allocation2 + $0x3e0] sm:$0xff]
  %v1484 = vld [vmem:[#allocation2 + $0x3e8] sm:$0xff]
  %v1485 = vld [vmem:[#allocation2 + $0x3f0] sm:$0xff]
  %v1486 = vld [vmem:[#allocation2 + $0x3f8] sm:$0xff]
  %v1487 = vld [vmem:[%s5] sm:$0x3]
  %v1489 = vlaneseq
  %v1490 = vshrl.u32 %v1489, 7
  %v1491 = vsub.s32 0, %v1490
  %v1492 = vrot.slane %v1487, %v1491
  %v1493 = vlaneseq
  %v1494 = vshrl.u32 %v1493, 7
  %v1495 = vsub.s32 1, %v1494
  %v1496 = vrot.slane %v1487, %v1495
  %v1627 = vunpack.c.l.b16 %v1359
  %v1628 = vunpack.c.h.b16 %v1359
  %v1629 = vunpack.c.l.b16 %v1360
  %v1630 = vunpack.c.h.b16 %v1360
  %v1631 = vunpack.c.l.b16 %v1361
  %v1632 = vunpack.c.h.b16 %v1361
  %v1633 = vunpack.c.l.b16 %v1362
  %v1634 = vunpack.c.h.b16 %v1362
  %v1635 = vunpack.c.l.b16 %v1363
  %v1636 = vunpack.c.h.b16 %v1363
  %v1637 = vunpack.c.l.b16 %v1364
  %v1638 = vunpack.c.h.b16 %v1364
  %v1639 = vunpack.c.l.b16 %v1365
  %v1640 = vunpack.c.h.b16 %v1365
  %v1641 = vunpack.c.l.b16 %v1366
  %v1642 = vunpack.c.h.b16 %v1366
  %v1643 = vunpack.c.l.b16 %v1367
  %v1644 = vunpack.c.h.b16 %v1367
  %v1645 = vunpack.c.l.b16 %v1368
  %v1646 = vunpack.c.h.b16 %v1368
  %v1647 = vunpack.c.l.b16 %v1369
  %v1648 = vunpack.c.h.b16 %v1369
  %v1649 = vunpack.c.l.b16 %v1370
  %v1650 = vunpack.c.h.b16 %v1370
  %v1651 = vunpack.c.l.b16 %v1371
  %v1652 = vunpack.c.h.b16 %v1371
  %v1653 = vunpack.c.l.b16 %v1372
  %v1654 = vunpack.c.h.b16 %v1372
  %v1655 = vunpack.c.l.b16 %v1373
  %v1656 = vunpack.c.h.b16 %v1373
  %v1657 = vunpack.c.l.b16 %v1374
  %v1658 = vunpack.c.h.b16 %v1374
  %v1659 = vunpack.c.l.b16 %v1375
  %v1660 = vunpack.c.h.b16 %v1375
  %v1661 = vunpack.c.l.b16 %v1376
  %v1662 = vunpack.c.h.b16 %v1376
  %v1663 = vunpack.c.l.b16 %v1377
  %v1664 = vunpack.c.h.b16 %v1377
  %v1665 = vunpack.c.l.b16 %v1378
  %v1666 = vunpack.c.h.b16 %v1378
  %v1667 = vunpack.c.l.b16 %v1379
  %v1668 = vunpack.c.h.b16 %v1379
  %v1669 = vunpack.c.l.b16 %v1380
  %v1670 = vunpack.c.h.b16 %v1380
  %v1671 = vunpack.c.l.b16 %v1381
  %v1672 = vunpack.c.h.b16 %v1381
  %v1673 = vunpack.c.l.b16 %v1382
  %v1674 = vunpack.c.h.b16 %v1382
  %v1675 = vunpack.c.l.b16 %v1383
  %v1676 = vunpack.c.h.b16 %v1383
  %v1677 = vunpack.c.l.b16 %v1384
  %v1678 = vunpack.c.h.b16 %v1384
  %v1679 = vunpack.c.l.b16 %v1385
  %v1680 = vunpack.c.h.b16 %v1385
  %v1681 = vunpack.c.l.b16 %v1386
  %v1682 = vunpack.c.h.b16 %v1386
  %v1683 = vunpack.c.l.b16 %v1387
  %v1684 = vunpack.c.h.b16 %v1387
  %v1685 = vunpack.c.l.b16 %v1388
  %v1686 = vunpack.c.h.b16 %v1388
  %v1687 = vunpack.c.l.b16 %v1389
  %v1688 = vunpack.c.h.b16 %v1389
  %v1689 = vunpack.c.l.b16 %v1390
  %v1690 = vunpack.c.h.b16 %v1390
  %v1691 = vunpack.c.l.b16 %v1391
  %v1692 = vunpack.c.h.b16 %v1391
  %v1693 = vunpack.c.l.b16 %v1392
  %v1694 = vunpack.c.h.b16 %v1392
  %v1695 = vunpack.c.l.b16 %v1393
  %v1696 = vunpack.c.h.b16 %v1393
  %v1697 = vunpack.c.l.b16 %v1394
  %v1698 = vunpack.c.h.b16 %v1394
  %v1699 = vunpack.c.l.b16 %v1395
  %v1700 = vunpack.c.h.b16 %v1395
  %v1701 = vunpack.c.l.b16 %v1396
  %v1702 = vunpack.c.h.b16 %v1396
  %v1703 = vunpack.c.l.b16 %v1397
  %v1704 = vunpack.c.h.b16 %v1397
  %v1705 = vunpack.c.l.b16 %v1398
  %v1706 = vunpack.c.h.b16 %v1398
  %v1707 = vunpack.c.l.b16 %v1399
  %v1708 = vunpack.c.h.b16 %v1399
  %v1709 = vunpack.c.l.b16 %v1400
  %v1710 = vunpack.c.h.b16 %v1400
  %v1711 = vunpack.c.l.b16 %v1401
  %v1712 = vunpack.c.h.b16 %v1401
  %v1713 = vunpack.c.l.b16 %v1402
  %v1714 = vunpack.c.h.b16 %v1402
  %v1715 = vunpack.c.l.b16 %v1403
  %v1716 = vunpack.c.h.b16 %v1403
  %v1717 = vunpack.c.l.b16 %v1404
  %v1718 = vunpack.c.h.b16 %v1404
  %v1719 = vunpack.c.l.b16 %v1405
  %v1720 = vunpack.c.h.b16 %v1405
  %v1721 = vunpack.c.l.b16 %v1406
  %v1722 = vunpack.c.h.b16 %v1406
  %v1723 = vunpack.c.l.b16 %v1407
  %v1724 = vunpack.c.h.b16 %v1407
  %v1725 = vunpack.c.l.b16 %v1408
  %v1726 = vunpack.c.h.b16 %v1408
  %v1727 = vunpack.c.l.b16 %v1409
  %v1728 = vunpack.c.h.b16 %v1409
  %v1729 = vunpack.c.l.b16 %v1410
  %v1730 = vunpack.c.h.b16 %v1410
  %v1731 = vunpack.c.l.b16 %v1411
  %v1732 = vunpack.c.h.b16 %v1411
  %v1733 = vunpack.c.l.b16 %v1412
  %v1734 = vunpack.c.h.b16 %v1412
  %v1735 = vunpack.c.l.b16 %v1413
  %v1736 = vunpack.c.h.b16 %v1413
  %v1737 = vunpack.c.l.b16 %v1414
  %v1738 = vunpack.c.h.b16 %v1414
  %v1739 = vunpack.c.l.b16 %v1415
  %v1740 = vunpack.c.h.b16 %v1415
  %v1741 = vunpack.c.l.b16 %v1416
  %v1742 = vunpack.c.h.b16 %v1416
  %v1743 = vunpack.c.l.b16 %v1417
  %v1744 = vunpack.c.h.b16 %v1417
  %v1745 = vunpack.c.l.b16 %v1418
  %v1746 = vunpack.c.h.b16 %v1418
  %v1747 = vunpack.c.l.b16 %v1419
  %v1748 = vunpack.c.h.b16 %v1419
  %v1749 = vunpack.c.l.b16 %v1420
  %v1750 = vunpack.c.h.b16 %v1420
  %v1751 = vunpack.c.l.b16 %v1421
  %v1752 = vunpack.c.h.b16 %v1421
  %v1753 = vunpack.c.l.b16 %v1422
  %v1754 = vunpack.c.h.b16 %v1422
  %v1755 = vunpack.c.l.b16 %v1423
  %v1756 = vunpack.c.h.b16 %v1423
  %v1757 = vunpack.c.l.b16 %v1424
  %v1758 = vunpack.c.h.b16 %v1424
  %v1759 = vunpack.c.l.b16 %v1425
  %v1760 = vunpack.c.h.b16 %v1425
  %v1761 = vunpack.c.l.b16 %v1426
  %v1762 = vunpack.c.h.b16 %v1426
  %v1763 = vunpack.c.l.b16 %v1427
  %v1764 = vunpack.c.h.b16 %v1427
  %v1765 = vunpack.c.l.b16 %v1428
  %v1766 = vunpack.c.h.b16 %v1428
  %v1767 = vunpack.c.l.b16 %v1429
  %v1768 = vunpack.c.h.b16 %v1429
  %v1769 = vunpack.c.l.b16 %v1430
  %v1770 = vunpack.c.h.b16 %v1430
  %v1771 = vunpack.c.l.b16 %v1431
  %v1772 = vunpack.c.h.b16 %v1431
  %v1773 = vunpack.c.l.b16 %v1432
  %v1774 = vunpack.c.h.b16 %v1432
  %v1775 = vunpack.c.l.b16 %v1433
  %v1776 = vunpack.c.h.b16 %v1433
  %v1777 = vunpack.c.l.b16 %v1434
  %v1778 = vunpack.c.h.b16 %v1434
  %v1779 = vunpack.c.l.b16 %v1435
  %v1780 = vunpack.c.h.b16 %v1435
  %v1781 = vunpack.c.l.b16 %v1436
  %v1782 = vunpack.c.h.b16 %v1436
  %v1783 = vunpack.c.l.b16 %v1437
  %v1784 = vunpack.c.h.b16 %v1437
  %v1785 = vunpack.c.l.b16 %v1438
  %v1786 = vunpack.c.h.b16 %v1438
  %v1787 = vunpack.c.l.b16 %v1439
  %v1788 = vunpack.c.h.b16 %v1439
  %v1789 = vunpack.c.l.b16 %v1440
  %v1790 = vunpack.c.h.b16 %v1440
  %v1791 = vunpack.c.l.b16 %v1441
  %v1792 = vunpack.c.h.b16 %v1441
  %v1793 = vunpack.c.l.b16 %v1442
  %v1794 = vunpack.c.h.b16 %v1442
  %v1795 = vunpack.c.l.b16 %v1443
  %v1796 = vunpack.c.h.b16 %v1443
  %v1797 = vunpack.c.l.b16 %v1444
  %v1798 = vunpack.c.h.b16 %v1444
  %v1799 = vunpack.c.l.b16 %v1445
  %v1800 = vunpack.c.h.b16 %v1445
  %v1801 = vunpack.c.l.b16 %v1446
  %v1802 = vunpack.c.h.b16 %v1446
  %v1803 = vunpack.c.l.b16 %v1447
  %v1804 = vunpack.c.h.b16 %v1447
  %v1805 = vunpack.c.l.b16 %v1448
  %v1806 = vunpack.c.h.b16 %v1448
  %v1807 = vunpack.c.l.b16 %v1449
  %v1808 = vunpack.c.h.b16 %v1449
  %v1809 = vunpack.c.l.b16 %v1450
  %v1810 = vunpack.c.h.b16 %v1450
  %v1811 = vunpack.c.l.b16 %v1451
  %v1812 = vunpack.c.h.b16 %v1451
  %v1813 = vunpack.c.l.b16 %v1452
  %v1814 = vunpack.c.h.b16 %v1452
  %v1815 = vunpack.c.l.b16 %v1453
  %v1816 = vunpack.c.h.b16 %v1453
  %v1817 = vunpack.c.l.b16 %v1454
  %v1818 = vunpack.c.h.b16 %v1454
  %v1819 = vunpack.c.l.b16 %v1455
  %v1820 = vunpack.c.h.b16 %v1455
  %v1821 = vunpack.c.l.b16 %v1456
  %v1822 = vunpack.c.h.b16 %v1456
  %v1823 = vunpack.c.l.b16 %v1457
  %v1824 = vunpack.c.h.b16 %v1457
  %v1825 = vunpack.c.l.b16 %v1458
  %v1826 = vunpack.c.h.b16 %v1458
  %v1827 = vunpack.c.l.b16 %v1459
  %v1828 = vunpack.c.h.b16 %v1459
  %v1829 = vunpack.c.l.b16 %v1460
  %v1830 = vunpack.c.h.b16 %v1460
  %v1831 = vunpack.c.l.b16 %v1461
  %v1832 = vunpack.c.h.b16 %v1461
  %v1833 = vunpack.c.l.b16 %v1462
  %v1834 = vunpack.c.h.b16 %v1462
  %v1835 = vunpack.c.l.b16 %v1463
  %v1836 = vunpack.c.h.b16 %v1463
  %v1837 = vunpack.c.l.b16 %v1464
  %v1838 = vunpack.c.h.b16 %v1464
  %v1839 = vunpack.c.l.b16 %v1465
  %v1840 = vunpack.c.h.b16 %v1465
  %v1841 = vunpack.c.l.b16 %v1466
  %v1842 = vunpack.c.h.b16 %v1466
  %v1843 = vunpack.c.l.b16 %v1467
  %v1844 = vunpack.c.h.b16 %v1467
  %v1845 = vunpack.c.l.b16 %v1468
  %v1846 = vunpack.c.h.b16 %v1468
  %v1847 = vunpack.c.l.b16 %v1469
  %v1848 = vunpack.c.h.b16 %v1469
  %v1849 = vunpack.c.l.b16 %v1470
  %v1850 = vunpack.c.h.b16 %v1470
  %v1851 = vunpack.c.l.b16 %v1471
  %v1852 = vunpack.c.h.b16 %v1471
  %v1853 = vunpack.c.l.b16 %v1472
  %v1854 = vunpack.c.h.b16 %v1472
  %v1855 = vunpack.c.l.b16 %v1473
  %v1856 = vunpack.c.h.b16 %v1473
  %v1857 = vunpack.c.l.b16 %v1474
  %v1858 = vunpack.c.h.b16 %v1474
  %v1859 = vunpack.c.l.b16 %v1475
  %v1860 = vunpack.c.h.b16 %v1475
  %v1861 = vunpack.c.l.b16 %v1476
  %v1862 = vunpack.c.h.b16 %v1476
  %v1863 = vunpack.c.l.b16 %v1477
  %v1864 = vunpack.c.h.b16 %v1477
  %v1865 = vunpack.c.l.b16 %v1478
  %v1866 = vunpack.c.h.b16 %v1478
  %v1867 = vunpack.c.l.b16 %v1479
  %v1868 = vunpack.c.h.b16 %v1479
  %v1869 = vunpack.c.l.b16 %v1480
  %v1870 = vunpack.c.h.b16 %v1480
  %v1871 = vunpack.c.l.b16 %v1481
  %v1872 = vunpack.c.h.b16 %v1481
  %v1873 = vunpack.c.l.b16 %v1482
  %v1874 = vunpack.c.h.b16 %v1482
  %v1875 = vunpack.c.l.b16 %v1483
  %v1876 = vunpack.c.h.b16 %v1483
  %v1877 = vunpack.c.l.b16 %v1484
  %v1878 = vunpack.c.h.b16 %v1484
  %v1879 = vunpack.c.l.b16 %v1485
  %v1880 = vunpack.c.h.b16 %v1485
  %v1881 = vunpack.c.l.b16 %v1486
  %v1882 = vunpack.c.h.b16 %v1486
  %v1883 = vpack.c.b16 %v1629, %v1627
  %v1884 = vpack.c.b16 %v1630, %v1628
  %v1885 = vpack.c.b16 %v1633, %v1631
  %v1886 = vpack.c.b16 %v1634, %v1632
  %v1887 = vpack.c.b16 %v1637, %v1635
  %v1888 = vpack.c.b16 %v1638, %v1636
  %v1889 = vpack.c.b16 %v1641, %v1639
  %v1890 = vpack.c.b16 %v1642, %v1640
  %v1891 = vpack.c.b16 %v1645, %v1643
  %v1892 = vpack.c.b16 %v1646, %v1644
  %v1893 = vpack.c.b16 %v1649, %v1647
  %v1894 = vpack.c.b16 %v1650, %v1648
  %v1895 = vpack.c.b16 %v1653, %v1651
  %v1896 = vpack.c.b16 %v1654, %v1652
  %v1897 = vpack.c.b16 %v1657, %v1655
  %v1898 = vpack.c.b16 %v1658, %v1656
  %v1899 = vpack.c.b16 %v1661, %v1659
  %v1900 = vpack.c.b16 %v1662, %v1660
  %v1901 = vpack.c.b16 %v1665, %v1663
  %v1902 = vpack.c.b16 %v1666, %v1664
  %v1903 = vpack.c.b16 %v1669, %v1667
  %v1904 = vpack.c.b16 %v1670, %v1668
  %v1905 = vpack.c.b16 %v1673, %v1671
  %v1906 = vpack.c.b16 %v1674, %v1672
  %v1907 = vpack.c.b16 %v1677, %v1675
  %v1908 = vpack.c.b16 %v1678, %v1676
  %v1909 = vpack.c.b16 %v1681, %v1679
  %v1910 = vpack.c.b16 %v1682, %v1680
  %v1911 = vpack.c.b16 %v1685, %v1683
  %v1912 = vpack.c.b16 %v1686, %v1684
  %v1913 = vpack.c.b16 %v1689, %v1687
  %v1914 = vpack.c.b16 %v1690, %v1688
  %v1915 = vpack.c.b16 %v1693, %v1691
  %v1916 = vpack.c.b16 %v1694, %v1692
  %v1917 = vpack.c.b16 %v1697, %v1695
  %v1918 = vpack.c.b16 %v1698, %v1696
  %v1919 = vpack.c.b16 %v1701, %v1699
  %v1920 = vpack.c.b16 %v1702, %v1700
  %v1921 = vpack.c.b16 %v1705, %v1703
  %v1922 = vpack.c.b16 %v1706, %v1704
  %v1923 = vpack.c.b16 %v1709, %v1707
  %v1924 = vpack.c.b16 %v1710, %v1708
  %v1925 = vpack.c.b16 %v1713, %v1711
  %v1926 = vpack.c.b16 %v1714, %v1712
  %v1927 = vpack.c.b16 %v1717, %v1715
  %v1928 = vpack.c.b16 %v1718, %v1716
  %v1929 = vpack.c.b16 %v1721, %v1719
  %v1930 = vpack.c.b16 %v1722, %v1720
  %v1931 = vpack.c.b16 %v1725, %v1723
  %v1932 = vpack.c.b16 %v1726, %v1724
  %v1933 = vpack.c.b16 %v1729, %v1727
  %v1934 = vpack.c.b16 %v1730, %v1728
  %v1935 = vpack.c.b16 %v1733, %v1731
  %v1936 = vpack.c.b16 %v1734, %v1732
  %v1937 = vpack.c.b16 %v1737, %v1735
  %v1938 = vpack.c.b16 %v1738, %v1736
  %v1939 = vpack.c.b16 %v1741, %v1739
  %v1940 = vpack.c.b16 %v1742, %v1740
  %v1941 = vpack.c.b16 %v1745, %v1743
  %v1942 = vpack.c.b16 %v1746, %v1744
  %v1943 = vpack.c.b16 %v1749, %v1747
  %v1944 = vpack.c.b16 %v1750, %v1748
  %v1945 = vpack.c.b16 %v1753, %v1751
  %v1946 = vpack.c.b16 %v1754, %v1752
  %v1947 = vpack.c.b16 %v1757, %v1755
  %v1948 = vpack.c.b16 %v1758, %v1756
  %v1949 = vpack.c.b16 %v1761, %v1759
  %v1950 = vpack.c.b16 %v1762, %v1760
  %v1951 = vpack.c.b16 %v1765, %v1763
  %v1952 = vpack.c.b16 %v1766, %v1764
  %v1953 = vpack.c.b16 %v1769, %v1767
  %v1954 = vpack.c.b16 %v1770, %v1768
  %v1955 = vpack.c.b16 %v1773, %v1771
  %v1956 = vpack.c.b16 %v1774, %v1772
  %v1957 = vpack.c.b16 %v1777, %v1775
  %v1958 = vpack.c.b16 %v1778, %v1776
  %v1959 = vpack.c.b16 %v1781, %v1779
  %v1960 = vpack.c.b16 %v1782, %v1780
  %v1961 = vpack.c.b16 %v1785, %v1783
  %v1962 = vpack.c.b16 %v1786, %v1784
  %v1963 = vpack.c.b16 %v1789, %v1787
  %v1964 = vpack.c.b16 %v1790, %v1788
  %v1965 = vpack.c.b16 %v1793, %v1791
  %v1966 = vpack.c.b16 %v1794, %v1792
  %v1967 = vpack.c.b16 %v1797, %v1795
  %v1968 = vpack.c.b16 %v1798, %v1796
  %v1969 = vpack.c.b16 %v1801, %v1799
  %v1970 = vpack.c.b16 %v1802, %v1800
  %v1971 = vpack.c.b16 %v1805, %v1803
  %v1972 = vpack.c.b16 %v1806, %v1804
  %v1973 = vpack.c.b16 %v1809, %v1807
  %v1974 = vpack.c.b16 %v1810, %v1808
  %v1975 = vpack.c.b16 %v1813, %v1811
  %v1976 = vpack.c.b16 %v1814, %v1812
  %v1977 = vpack.c.b16 %v1817, %v1815
  %v1978 = vpack.c.b16 %v1818, %v1816
  %v1979 = vpack.c.b16 %v1821, %v1819
  %v1980 = vpack.c.b16 %v1822, %v1820
  %v1981 = vpack.c.b16 %v1825, %v1823
  %v1982 = vpack.c.b16 %v1826, %v1824
  %v1983 = vpack.c.b16 %v1829, %v1827
  %v1984 = vpack.c.b16 %v1830, %v1828
  %v1985 = vpack.c.b16 %v1833, %v1831
  %v1986 = vpack.c.b16 %v1834, %v1832
  %v1987 = vpack.c.b16 %v1837, %v1835
  %v1988 = vpack.c.b16 %v1838, %v1836
  %v1989 = vpack.c.b16 %v1841, %v1839
  %v1990 = vpack.c.b16 %v1842, %v1840
  %v1991 = vpack.c.b16 %v1845, %v1843
  %v1992 = vpack.c.b16 %v1846, %v1844
  %v1993 = vpack.c.b16 %v1849, %v1847
  %v1994 = vpack.c.b16 %v1850, %v1848
  %v1995 = vpack.c.b16 %v1853, %v1851
  %v1996 = vpack.c.b16 %v1854, %v1852
  %v1997 = vpack.c.b16 %v1857, %v1855
  %v1998 = vpack.c.b16 %v1858, %v1856
  %v1999 = vpack.c.b16 %v1861, %v1859
  %v2000 = vpack.c.b16 %v1862, %v1860
  %v2001 = vpack.c.b16 %v1865, %v1863
  %v2002 = vpack.c.b16 %v1866, %v1864
  %v2003 = vpack.c.b16 %v1869, %v1867
  %v2004 = vpack.c.b16 %v1870, %v1868
  %v2005 = vpack.c.b16 %v1873, %v1871
  %v2006 = vpack.c.b16 %v1874, %v1872
  %v2007 = vpack.c.b16 %v1877, %v1875
  %v2008 = vpack.c.b16 %v1878, %v1876
  %v2009 = vpack.c.b16 %v1881, %v1879
  %v2010 = vpack.c.b16 %v1882, %v1880
  %2139 = vmatprep.subr.bf16.mxu0 %v1898
  %2140 = vmatpush1.bf16.msra.mxu0 %v1897
  %2141 = vmatprep.subr.bf16.mxu0 %v1896
  %2142 = vmatpush1.bf16.msra.mxu0 %v1895
  %2143 = vmatprep.subr.bf16.mxu0 %v1894
  %2144 = vmatpush1.bf16.msra.mxu0 %v1893
  %2145 = vmatprep.subr.bf16.mxu0 %v1892
  %2146 = vmatpush1.bf16.msra.mxu0 %v1891
  %2147 = vmatprep.subr.bf16.mxu0 %v1890
  %2148 = vmatpush1.bf16.msra.mxu0 %v1889
  %2149 = vmatprep.subr.bf16.mxu0 %v1888
  %2150 = vmatpush1.bf16.msra.mxu0 %v1887
  %2151 = vmatprep.subr.bf16.mxu0 %v1886
  %2152 = vmatpush1.bf16.msra.mxu0 %v1885
  %2153 = vmatprep.subr.bf16.mxu0 %v1884
  %2154 = vmatpush1.bf16.msra.mxu0 %v1883
  %2155 = vmatprep.subr.bf16.mxu0 %v1914
  %2156 = vmatpush2.bf16.msra.mxu0 %v1913
  %2157 = vmatprep.subr.bf16.mxu0 %v1912
  %2158 = vmatpush2.bf16.msra.mxu0 %v1911
  %2159 = vmatprep.subr.bf16.mxu0 %v1910
  %2160 = vmatpush2.bf16.msra.mxu0 %v1909
  %2161 = vmatprep.subr.bf16.mxu0 %v1908
  %2162 = vmatpush2.bf16.msra.mxu0 %v1907
  %2163 = vmatprep.subr.bf16.mxu0 %v1906
  %2164 = vmatpush2.bf16.msra.mxu0 %v1905
  %2165 = vmatprep.subr.bf16.mxu0 %v1904
  %2166 = vmatpush2.bf16.msra.mxu0 %v1903
  %2167 = vmatprep.subr.bf16.mxu0 %v1902
  %2168 = vmatpush2.bf16.msra.mxu0 %v1901
  %2169 = vmatprep.subr.bf16.mxu0 %v1900
  %2170 = vmatpush2.bf16.msra.mxu0 %v1899
  %2171 = vmatprep.mubr.bf16.mxu0 %v1352
  %2172 = vmatmul.mubr.bf16.gmra.mxu0 %v1351
  %v2173 = vpop.f32.mrf.mxu0
  %v2174 = vadd.f32 %v1492, %v2173
  %v2175 = vpop.f32.mrf.mxu0
  %v2176 = vadd.f32 %v1496, %v2175
  %v2177 = vpop.f32.mrf.mxu0
  %v2178 = vpop.f32.mrf.mxu0
  %2179 = vdwg.mxu0
  %2180 = vmatprep.subr.bf16.mxu0 %v1930
  %2181 = vmatpush1.bf16.msra.mxu0 %v1929
  %2182 = vmatprep.subr.bf16.mxu0 %v1928
  %2183 = vmatpush1.bf16.msra.mxu0 %v1927
  %2184 = vmatprep.subr.bf16.mxu0 %v1926
  %2185 = vmatpush1.bf16.msra.mxu0 %v1925
  %2186 = vmatprep.subr.bf16.mxu0 %v1924
  %2187 = vmatpush1.bf16.msra.mxu0 %v1923
  %2188 = vmatprep.subr.bf16.mxu0 %v1922
  %2189 = vmatpush1.bf16.msra.mxu0 %v1921
  %2190 = vmatprep.subr.bf16.mxu0 %v1920
  %2191 = vmatpush1.bf16.msra.mxu0 %v1919
  %2192 = vmatprep.subr.bf16.mxu0 %v1918
  %2193 = vmatpush1.bf16.msra.mxu0 %v1917
  %2194 = vmatprep.subr.bf16.mxu0 %v1916
  %2195 = vmatpush1.bf16.msra.mxu0 %v1915
  %2196 = vmatprep.subr.bf16.mxu0 %v1946
  %2197 = vmatpush2.bf16.msra.mxu0 %v1945
  %2198 = vmatprep.subr.bf16.mxu0 %v1944
  %2199 = vmatpush2.bf16.msra.mxu0 %v1943
  %2200 = vmatprep.subr.bf16.mxu0 %v1942
  %2201 = vmatpush2.bf16.msra.mxu0 %v1941
  %2202 = vmatprep.subr.bf16.mxu0 %v1940
  %2203 = vmatpush2.bf16.msra.mxu0 %v1939
  %2204 = vmatprep.subr.bf16.mxu0 %v1938
  %2205 = vmatpush2.bf16.msra.mxu0 %v1937
  %2206 = vmatprep.subr.bf16.mxu0 %v1936
  %2207 = vmatpush2.bf16.msra.mxu0 %v1935
  %2208 = vmatprep.subr.bf16.mxu0 %v1934
  %2209 = vmatpush2.bf16.msra.mxu0 %v1933
  %2210 = vmatprep.subr.bf16.mxu0 %v1932
  %2211 = vmatpush2.bf16.msra.mxu0 %v1931
  %2212 = vmatprep.mubr.bf16.mxu0 %v1354
  %2213 = vmatmul.mubr.bf16.gmra.mxu0 %v1353
  %v2214 = vpop.f32.mrf.mxu0
  %v2215 = vadd.f32 %v2174, %v2214
  %v2216 = vpop.f32.mrf.mxu0
  %v2217 = vadd.f32 %v2176, %v2216
  %v2218 = vpop.f32.mrf.mxu0
  %v2219 = vpop.f32.mrf.mxu0
  %2220 = vdwg.mxu0
  %2221 = vmatprep.subr.bf16.mxu0 %v1962
  %2222 = vmatpush1.bf16.msra.mxu0 %v1961
  %2223 = vmatprep.subr.bf16.mxu0 %v1960
  %2224 = vmatpush1.bf16.msra.mxu0 %v1959
  %2225 = vmatprep.subr.bf16.mxu0 %v1958
  %2226 = vmatpush1.bf16.msra.mxu0 %v1957
  %2227 = vmatprep.subr.bf16.mxu0 %v1956
  %2228 = vmatpush1.bf16.msra.mxu0 %v1955
  %2229 = vmatprep.subr.bf16.mxu0 %v1954
  %2230 = vmatpush1.bf16.msra.mxu0 %v1953
  %2231 = vmatprep.subr.bf16.mxu0 %v1952
  %2232 = vmatpush1.bf16.msra.mxu0 %v1951
  %2233 = vmatprep.subr.bf16.mxu0 %v1950
  %2234 = vmatpush1.bf16.msra.mxu0 %v1949
  %2235 = vmatprep.subr.bf16.mxu0 %v1948
  %2236 = vmatpush1.bf16.msra.mxu0 %v1947
  %2237 = vmatprep.subr.bf16.mxu0 %v1978
  %2238 = vmatpush2.bf16.msra.mxu0 %v1977
  %2239 = vmatprep.subr.bf16.mxu0 %v1976
  %2240 = vmatpush2.bf16.msra.mxu0 %v1975
  %2241 = vmatprep.subr.bf16.mxu0 %v1974
  %2242 = vmatpush2.bf16.msra.mxu0 %v1973
  %2243 = vmatprep.subr.bf16.mxu0 %v1972
  %2244 = vmatpush2.bf16.msra.mxu0 %v1971
  %2245 = vmatprep.subr.bf16.mxu0 %v1970
  %2246 = vmatpush2.bf16.msra.mxu0 %v1969
  %2247 = vmatprep.subr.bf16.mxu0 %v1968
  %2248 = vmatpush2.bf16.msra.mxu0 %v1967
  %2249 = vmatprep.subr.bf16.mxu0 %v1966
  %2250 = vmatpush2.bf16.msra.mxu0 %v1965
  %2251 = vmatprep.subr.bf16.mxu0 %v1964
  %2252 = vmatpush2.bf16.msra.mxu0 %v1963
  %2253 = vmatprep.mubr.bf16.mxu0 %v1356
  %2254 = vmatmul.mubr.bf16.gmra.mxu0 %v1355
  %v2255 = vpop.f32.mrf.mxu0
  %v2256 = vadd.f32 %v2215, %v2255
  %v2257 = vpop.f32.mrf.mxu0
  %v2258 = vadd.f32 %v2217, %v2257
  %v2259 = vpop.f32.mrf.mxu0
  %v2260 = vpop.f32.mrf.mxu0
  %2261 = vdwg.mxu0
  %2262 = vmatprep.subr.bf16.mxu0 %v1994
  %2263 = vmatpush1.bf16.msra.mxu0 %v1993
  %2264 = vmatprep.subr.bf16.mxu0 %v1992
  %2265 = vmatpush1.bf16.msra.mxu0 %v1991
  %2266 = vmatprep.subr.bf16.mxu0 %v1990
  %2267 = vmatpush1.bf16.msra.mxu0 %v1989
  %2268 = vmatprep.subr.bf16.mxu0 %v1988
  %2269 = vmatpush1.bf16.msra.mxu0 %v1987
  %2270 = vmatprep.subr.bf16.mxu0 %v1986
  %2271 = vmatpush1.bf16.msra.mxu0 %v1985
  %2272 = vmatprep.subr.bf16.mxu0 %v1984
  %2273 = vmatpush1.bf16.msra.mxu0 %v1983
  %2274 = vmatprep.subr.bf16.mxu0 %v1982
  %2275 = vmatpush1.bf16.msra.mxu0 %v1981
  %2276 = vmatprep.subr.bf16.mxu0 %v1980
  %2277 = vmatpush1.bf16.msra.mxu0 %v1979
  %2278 = vmatprep.subr.bf16.mxu0 %v2010
  %2279 = vmatpush2.bf16.msra.mxu0 %v2009
  %2280 = vmatprep.subr.bf16.mxu0 %v2008
  %2281 = vmatpush2.bf16.msra.mxu0 %v2007
  %2282 = vmatprep.subr.bf16.mxu0 %v2006
  %2283 = vmatpush2.bf16.msra.mxu0 %v2005
  %2284 = vmatprep.subr.bf16.mxu0 %v2004
  %2285 = vmatpush2.bf16.msra.mxu0 %v2003
  %2286 = vmatprep.subr.bf16.mxu0 %v2002
  %2287 = vmatpush2.bf16.msra.mxu0 %v2001
  %2288 = vmatprep.subr.bf16.mxu0 %v2000
  %2289 = vmatpush2.bf16.msra.mxu0 %v1999
  %2290 = vmatprep.subr.bf16.mxu0 %v1998
  %2291 = vmatpush2.bf16.msra.mxu0 %v1997
  %2292 = vmatprep.subr.bf16.mxu0 %v1996
  %2293 = vmatpush2.bf16.msra.mxu0 %v1995
  %2294 = vmatprep.mubr.bf16.mxu0 %v1358
  %2295 = vmatmul.mubr.bf16.gmra.mxu0 %v1357
  %v2296 = vpop.f32.mrf.mxu0
  %v2297 = vadd.f32 %v2256, %v2296
  %v2298 = vpop.f32.mrf.mxu0
  %v2299 = vadd.f32 %v2258, %v2298
  %v2300 = vpop.f32.mrf.mxu0
  %v2301 = vpop.f32.mrf.mxu0
  %2302 = vdwg.mxu0
  %v2303 = vmax.f32 %v2297, 0.0
  %v2304 = vmax.f32 %v2299, 0.0
  %v2305 = vpack.c.bf16 %v2303, %v2303
  %v2306 = vpack.c.bf16 %v2304, %v2304
  %v2307 = vld [vmem:[%s6] sm:$0xf]
  %v2308 = vld [vmem:[%s6 + $0x4] sm:$0xf]
  %v2309 = vld [vmem:[%s6 + $0x8] sm:$0xf]
  %v2310 = vld [vmem:[%s6 + $0xc] sm:$0xf]
  %v2311 = vld [vmem:[%s6 + $0x10] sm:$0xf]
  %v2312 = vld [vmem:[%s6 + $0x14] sm:$0xf]
  %v2313 = vld [vmem:[%s6 + $0x18] sm:$0xf]
  %v2314 = vld [vmem:[%s6 + $0x1c] sm:$0xf]
  %v2315 = vld [vmem:[%s6 + $0x20] sm:$0xf]
  %v2316 = vld [vmem:[%s6 + $0x24] sm:$0xf]
  %v2317 = vld [vmem:[%s6 + $0x28] sm:$0xf]
  %v2318 = vld [vmem:[%s6 + $0x2c] sm:$0xf]
  %v2319 = vld [vmem:[%s6 + $0x30] sm:$0xf]
  %v2320 = vld [vmem:[%s6 + $0x34] sm:$0xf]
  %v2321 = vld [vmem:[%s6 + $0x38] sm:$0xf]
  %v2322 = vld [vmem:[%s6 + $0x3c] sm:$0xf]
  %v2323 = vld [vmem:[%s6 + $0x40] sm:$0xf]
  %v2324 = vld [vmem:[%s6 + $0x44] sm:$0xf]
  %v2325 = vld [vmem:[%s6 + $0x48] sm:$0xf]
  %v2326 = vld [vmem:[%s6 + $0x4c] sm:$0xf]
  %v2327 = vld [vmem:[%s6 + $0x50] sm:$0xf]
  %v2328 = vld [vmem:[%s6 + $0x54] sm:$0xf]
  %v2329 = vld [vmem:[%s6 + $0x58] sm:$0xf]
  %v2330 = vld [vmem:[%s6 + $0x5c] sm:$0xf]
  %v2331 = vld [vmem:[%s6 + $0x60] sm:$0xf]
  %v2332 = vld [vmem:[%s6 + $0x64] sm:$0xf]
  %v2333 = vld [vmem:[%s6 + $0x68] sm:$0xf]
  %v2334 = vld [vmem:[%s6 + $0x6c] sm:$0xf]
  %v2335 = vld [vmem:[%s6 + $0x70] sm:$0xf]
  %v2336 = vld [vmem:[%s6 + $0x74] sm:$0xf]
  %v2337 = vld [vmem:[%s6 + $0x78] sm:$0xf]
  %v2338 = vld [vmem:[%s6 + $0x7c] sm:$0xf]
  %v2339 = vld [vmem:[%s7] sm:$0x1]
  %v2341 = vlaneseq
  %v2342 = vshrl.u32 %v2341, 7
  %v2343 = vsub.s32 0, %v2342
  %v2344 = vrot.slane %v2339, %v2343
  %v2378 = vunpack.c.l.b16 %v2307
  %v2379 = vunpack.c.l.b16 %v2308
  %v2380 = vunpack.c.l.b16 %v2309
  %v2381 = vunpack.c.l.b16 %v2310
  %v2382 = vunpack.c.l.b16 %v2311
  %v2383 = vunpack.c.l.b16 %v2312
  %v2384 = vunpack.c.l.b16 %v2313
  %v2385 = vunpack.c.l.b16 %v2314
  %v2386 = vunpack.c.l.b16 %v2315
  %v2387 = vunpack.c.l.b16 %v2316
  %v2388 = vunpack.c.l.b16 %v2317
  %v2389 = vunpack.c.l.b16 %v2318
  %v2390 = vunpack.c.l.b16 %v2319
  %v2391 = vunpack.c.l.b16 %v2320
  %v2392 = vunpack.c.l.b16 %v2321
  %v2393 = vunpack.c.l.b16 %v2322
  %v2394 = vunpack.c.l.b16 %v2323
  %v2395 = vunpack.c.l.b16 %v2324
  %v2396 = vunpack.c.l.b16 %v2325
  %v2397 = vunpack.c.l.b16 %v2326
  %v2398 = vunpack.c.l.b16 %v2327
  %v2399 = vunpack.c.l.b16 %v2328
  %v2400 = vunpack.c.l.b16 %v2329
  %v2401 = vunpack.c.l.b16 %v2330
  %v2402 = vunpack.c.l.b16 %v2331
  %v2403 = vunpack.c.l.b16 %v2332
  %v2404 = vunpack.c.l.b16 %v2333
  %v2405 = vunpack.c.l.b16 %v2334
  %v2406 = vunpack.c.l.b16 %v2335
  %v2407 = vunpack.c.l.b16 %v2336
  %v2408 = vunpack.c.l.b16 %v2337
  %v2409 = vunpack.c.l.b16 %v2338
  %v2410 = vpack.c.b16 %v2379, %v2378
  %v2411 = vpack.c.b16 %v2381, %v2380
  %v2412 = vpack.c.b16 %v2383, %v2382
  %v2413 = vpack.c.b16 %v2385, %v2384
  %v2414 = vpack.c.b16 %v2387, %v2386
  %v2415 = vpack.c.b16 %v2389, %v2388
  %v2416 = vpack.c.b16 %v2391, %v2390
  %v2417 = vpack.c.b16 %v2393, %v2392
  %v2418 = vpack.c.b16 %v2395, %v2394
  %v2419 = vpack.c.b16 %v2397, %v2396
  %v2420 = vpack.c.b16 %v2399, %v2398
  %v2421 = vpack.c.b16 %v2401, %v2400
  %v2422 = vpack.c.b16 %v2403, %v2402
  %v2423 = vpack.c.b16 %v2405, %v2404
  %v2424 = vpack.c.b16 %v2407, %v2406
  %v2425 = vpack.c.b16 %v2409, %v2408
  %2442 = vmatprep.subr.bf16.mxu0 0
  %2443 = vmatpush1.bf16.msra.mxu0 %v2417
  %2444 = vmatprep.subr.bf16.mxu0 0
  %2445 = vmatpush1.bf16.msra.mxu0 %v2416
  %2446 = vmatprep.subr.bf16.mxu0 0
  %2447 = vmatpush1.bf16.msra.mxu0 %v2415
  %2448 = vmatprep.subr.bf16.mxu0 0
  %2449 = vmatpush1.bf16.msra.mxu0 %v2414
  %2450 = vmatprep.subr.bf16.mxu0 0
  %2451 = vmatpush1.bf16.msra.mxu0 %v2413
  %2452 = vmatprep.subr.bf16.mxu0 0
  %2453 = vmatpush1.bf16.msra.mxu0 %v2412
  %2454 = vmatprep.subr.bf16.mxu0 0
  %2455 = vmatpush1.bf16.msra.mxu0 %v2411
  %2456 = vmatprep.subr.bf16.mxu0 0
  %2457 = vmatpush1.bf16.msra.mxu0 %v2410
  %2458 = vmatprep.subr.bf16.mxu0 0
  %2459 = vmatpush2.bf16.msra.mxu0 %v2425
  %2460 = vmatprep.subr.bf16.mxu0 0
  %2461 = vmatpush2.bf16.msra.mxu0 %v2424
  %2462 = vmatprep.subr.bf16.mxu0 0
  %2463 = vmatpush2.bf16.msra.mxu0 %v2423
  %2464 = vmatprep.subr.bf16.mxu0 0
  %2465 = vmatpush2.bf16.msra.mxu0 %v2422
  %2466 = vmatprep.subr.bf16.mxu0 0
  %2467 = vmatpush2.bf16.msra.mxu0 %v2421
  %2468 = vmatprep.subr.bf16.mxu0 0
  %2469 = vmatpush2.bf16.msra.mxu0 %v2420
  %2470 = vmatprep.subr.bf16.mxu0 0
  %2471 = vmatpush2.bf16.msra.mxu0 %v2419
  %2472 = vmatprep.subr.bf16.mxu0 0
  %2473 = vmatpush2.bf16.msra.mxu0 %v2418
  %2474 = vmatprep.mubr.bf16.mxu0 %v2306
  %2475 = vmatmul.mubr.bf16.gmra.mxu0 %v2305
  %v2476 = vpop.f32.mrf.mxu0
  %v2477 = vadd.f32 %v2344, %v2476
  %v2478 = vpop.f32.mrf.mxu0
  %v2479 = vpop.f32.mrf.mxu0
  %v2480 = vpop.f32.mrf.mxu0
  %2481 = vdwg.mxu0
  %2482 = vst [vmem:[%s9] sm:$0xff] %v2477
  // Predicated region
  $region68: #{actor_critic_forward.1} parent=0 // pred_check
    _
  $region69: #{actor_critic_forward.1} parent=0 // pred_check_branch
    %2484 = sbr.rel (0) target = $region71
  $region70: #{actor_critic_forward.1} parent=0 // pred_region
    _
  $region71: #{actor_critic_forward.1} parent=0 // pred_fallthru
    _
  // Predicated region
  $region72: #{actor_critic_forward.1} parent=0 // pred_check
    _
  $region73: #{actor_critic_forward.1} parent=0 // pred_check_branch
    %2486 = sbr.rel (0) target = $region75
  $region74: #{actor_critic_forward.1} parent=0 // pred_region
    _
  $region75: #{actor_critic_forward.1} parent=0 // pred_fallthru
    _
  %2487 = vsyncmov [#allocation3]
  %s2488 = vpop.sfrf %2487
  %p2489 = scmp.eq.s32.totalorder %s2488, 0
  %p2490 = pneg %p2489
  %2492 = shalt.err (%p2490)

</llo_original>
